<compile_context>
chip_gen: v6e
topology: v6e:2x2x1
jax: 0.10.0
libtpu: 0.0.40
codegen_flags: <defaults>
</compile_context>

<pallas_src>
import jax
import jax.numpy as jnp
from jax.experimental import pallas as pl
from jax.experimental.pallas import tpu as pltpu

EPS = 1e-5          # PyTorch GroupNorm default eps
LANE_CHUNK = 128    # inner chunk width = one full vreg lane extent


def _group_norm_relu(chans, num_groups, gamma_ref, beta_ref, store_fn=None):
    """GroupNorm + ReLU over per-channel (L, CHUNK) slabs.

    Stats are per lane (= per sample); batch never reduces across lanes
    (padded lanes just produce rstd = rsqrt(eps) and are sliced off later).
    The centered values are NOT retained between passes (recomputed) to keep
    vreg pressure low.  If `store_fn(channel_idx, value)` is given, results
    are streamed straight to it (fused apply+store); otherwise a list of
    per-channel slabs is returned.
    """
    C = len(chans)
    L = chans[0].shape[0]
    cg = C // num_groups
    inv_cnt = 1.0 / float(cg * L)
    outs = []
    for g in range(num_groups):
        grp = chans[g * cg:(g + 1) * cg]
        # pass 1: mean over (channels-in-group, L); lane axis kept.
        s = jnp.sum(grp[0], axis=0, keepdims=True)
        for c in grp[1:]:
            s = s + jnp.sum(c, axis=0, keepdims=True)
        mean = s * inv_cnt                                     # (1, CHUNK)
        # pass 2: two-pass variance (matches PyTorch), centered vals recomputed.
        ss = None
        for c in grp:
            d = c - mean
            t = jnp.sum(d * d, axis=0, keepdims=True)
            ss = t if ss is None else ss + t
        rstd = jax.lax.rsqrt(ss * inv_cnt + EPS)               # (1, CHUNK), EUP
        # pass 3: fused (x - mean) * (gamma * rstd) + beta, then ReLU.
        for k, c in enumerate(grp):
            cidx = g * cg + k
            scale = gamma_ref[0, cidx] * rstd                  # (1, CHUNK)
            val = jnp.maximum((c - mean) * scale + beta_ref[0, cidx], 0.0)
            if store_fn is None:
                outs.append(val)
            else:
                store_fn(cidx, val)
    return outs


def basic_magic_cnn_kernel(x_ref, w1_ref, b1_ref, g1w_ref, g1b_ref,
                           w2_ref, b2_ref, g2w_ref, g2b_ref, o_ref):
    Cin, L, B = x_ref.shape
    C1, CK1 = w1_ref.shape
    K1 = CK1 // Cin
    C2, CK2 = w2_ref.shape
    K2 = CK2 // C1
    L1 = L - K1 + 1
    L2 = L1 - K2 + 1
    n_chunks = B // LANE_CHUNK        # static: B is a multiple of LANE_CHUNK

    # Walk the wide lane block in 128-lane chunks to bound live vregs while
    # keeping every load/store a full unmasked 128-lane access.
    @pl.loop(0, n_chunks)
    def _(j):
        off = pl.multiple_of(j * LANE_CHUNK, LANE_CHUNK)

        # ---- load x chunk (lane-dense) -----------------------------------
        x = [x_ref[ci, :, pl.ds(off, LANE_CHUNK)] for ci in range(Cin)]

        # ---- MagicConv(Cin, C1, K1): scalar-broadcast VPU FMAs -----------
        # (sublane-misaligned tap slices are cheap here; VALU is not binding)
        y1 = []
        for co in range(C1):
            acc = None
            for ci in range(Cin):
                for t in range(K1):
                    term = w1_ref[co, ci * K1 + t] * x[ci][t:t + L1, :]
                    acc = term if acc is None else acc + term
            y1.append(acc + b1_ref[0, co])

        # ---- GroupNorm(2, C1) + ReLU (Dropout1d = identity in eval) ------
        h1 = _group_norm_relu(y1, 2, g1w_ref, g1b_ref)

        # ---- MagicConv(C1, C2, K2): taps sliced on the fly from h1 -------
        y2 = []
        for co in range(C2):
            acc = None
            for ci in range(C1):
                for t in range(K2):
                    term = w2_ref[co, ci * K2 + t] * h1[ci][t:t + L2, :]
                    acc = term if acc is None else acc + term
            y2.append(acc + b2_ref[0, co])

        # ---- GroupNorm(4, C2) + ReLU fused into lane-dense stores --------
        def store(co, val):
            o_ref[co, :, pl.ds(off, LANE_CHUNK)] = val.astype(o_ref.dtype)

        _group_norm_relu(y2, 4, g2w_ref, g2b_ref, store_fn=store)


def _pick_lane_block(N, target):
    """Pick (b_blk, padded_N): b_blk a multiple of 128, >=2 grid steps when
    the batch allows it (feeds both v7x TensorCores), padded_N % b_blk == 0."""
    Np = -(-N // LANE_CHUNK) * LANE_CHUNK
    b = min(target, Np)
    b = max(LANE_CHUNK, (b // LANE_CHUNK) * LANE_CHUNK)
    if Np >= 2 * LANE_CHUNK and b > Np // 2:
        b = max(LANE_CHUNK, ((Np // 2) // LANE_CHUNK) * LANE_CHUNK)
    Np = -(-Np // b) * b
    return b, Np


def basic_magic_cnn(x, params, *, b_blk=4096):
    w1, b1, g1w, g1b, w2, b2, g2w, g2b = params
    N, Cin, L = x.shape
    C1, _, K1 = w1.shape
    C2, _, K2 = w2.shape
    L1 = L - K1 + 1
    L2 = L1 - K2 + 1

    b_blk, Np = _pick_lane_block(N, b_blk)
    n_blk = Np // b_blk

    # Batch on the lane axis.  (These transposes exist only to preserve the
    # PyTorch NCL interface; drop them if the consumer accepts N-minor layout.)
    x_t = jnp.transpose(x, (1, 2, 0)).astype(jnp.float32)      # (Cin, L, N)
    if Np != N:
        x_t = jnp.pad(x_t, ((0, 0), (0, 0), (0, Np - N)))

    # Tiny params -> SMEM-resident 2-D f32 arrays (scalar reads in-kernel).
    w1_s = w1.reshape(C1, Cin * K1).astype(jnp.float32)        # [co, ci*K1+t]
    w2_s = w2.reshape(C2, C1 * K2).astype(jnp.float32)         # [co, ci*K2+t]
    b1_s = b1.reshape(1, C1).astype(jnp.float32)
    g1w_s = g1w.reshape(1, C1).astype(jnp.float32)
    g1b_s = g1b.reshape(1, C1).astype(jnp.float32)
    b2_s = b2.reshape(1, C2).astype(jnp.float32)
    g2w_s = g2w.reshape(1, C2).astype(jnp.float32)
    g2b_s = g2b.reshape(1, C2).astype(jnp.float32)

    smem = pl.BlockSpec(memory_space=pltpu.MemorySpace.SMEM)

    # Explicit VMEM budget: double-buffered in+out blocks plus headroom,
    # capped at 32 MiB (safe even on v7x's 64 MiB core).
    block_bytes = 4 * (Cin * L + C2 * L2) * b_blk
    vmem_limit = int(min(32 << 20, max(8 << 20, 4 * block_bytes)))

    out_t = pl.pallas_call(
        basic_magic_cnn_kernel,
        out_shape=jax.ShapeDtypeStruct((C2, L2, Np), jnp.float32),
        grid=(n_blk,),
        in_specs=[
            pl.BlockSpec((Cin, L, b_blk), lambda n: (0, 0, n)),
            smem, smem, smem, smem, smem, smem, smem, smem,
        ],
        out_specs=pl.BlockSpec((C2, L2, b_blk), lambda n: (0, 0, n)),
        compiler_params=pltpu.CompilerParams(
            dimension_semantics=("parallel",),
            vmem_limit_bytes=vmem_limit),
    )(x_t, w1_s, b1_s, g1w_s, g1b_s, w2_s, b2_s, g2w_s, g2b_s)

    # Back to PyTorch NCL layout, drop batch padding.
    return jnp.transpose(out_t, (2, 0, 1))[:N]


def reference(x, params):
    """Pure-JAX reference (eval-mode forward of BasicMagicCNN)."""
    w1, b1, g1w, g1b, w2, b2, g2w, g2b = params

    def conv1d(h, w, b):
        y = jax.lax.conv_general_dilated(
            h, w, window_strides=(1,), padding="VALID",
            dimension_numbers=("NCH", "OIH", "NCH"))
        return y + b[None, :, None]

    def gn(h, G, gamma, beta):
        N, C, L = h.shape
        hr = h.reshape(N, G, -1)
        m = hr.mean(axis=2, keepdims=True)
        v = ((hr - m) ** 2).mean(axis=2, keepdims=True)
        hn = ((hr - m) / jnp.sqrt(v + EPS)).reshape(N, C, L)
        return hn * gamma[None, :, None] + beta[None, :, None]

    h = jnp.maximum(gn(conv1d(x, w1, b1), 2, g1w, g1b), 0.0)
    h = jnp.maximum(gn(conv1d(h, w2, b2), 4, g2w, g2b), 0.0)
    return h


if __name__ == "__main__":
    key = jax.random.PRNGKey(0)
    ks = jax.random.split(key, 9)

    # deterministic synthetic parameters (shapes per BasicMagicCNN.__init__)
    w1 = 0.5 * jax.random.normal(ks[0], (4, 1, 3), jnp.float32)    # MagicConv(1,4,k=3)
    b1 = 0.1 * jax.random.normal(ks[1], (4,), jnp.float32)
    g1w = 1.0 + 0.1 * jax.random.normal(ks[2], (4,), jnp.float32)  # GroupNorm(2,4)
    g1b = 0.1 * jax.random.normal(ks[3], (4,), jnp.float32)
    w2 = 0.3 * jax.random.normal(ks[4], (8, 4, 2), jnp.float32)    # MagicConv(4,8,k=2)
    b2 = 0.1 * jax.random.normal(ks[5], (8,), jnp.float32)
    g2w = 1.0 + 0.1 * jax.random.normal(ks[6], (8,), jnp.float32)  # GroupNorm(4,8)
    g2b = 0.1 * jax.random.normal(ks[7], (8,), jnp.float32)
    params = (w1, b1, g1w, g1b, w2, b2, g2w, g2b)

    # small input: batch=500 (pads to 512 lanes -> 2 parallel grid steps of a
    # 256-wide lane block, each walked in two 128-lane chunks), C=1, L=16
    #   -> output (500, 8, 13); exercises padding + the inner chunk loop.
    x = jax.random.normal(ks[8], (500, 1, 16), jnp.float32)

    out = jax.block_until_ready(basic_magic_cnn(x, params))
    ref = jax.block_until_ready(reference(x, params))

    assert out.shape == (500, 8, 13), out.shape
    assert jnp.allclose(out, ref, atol=1e-4, rtol=1e-4), float(jnp.max(jnp.abs(out - ref)))

    print("KERNEL_OK")
</pallas_src>

<mosaic_0001>
module attributes {stable_mosaic.version = 11 : i64} {
  func.func @basic_magic_cnn_kernel(%arg0: i32, %arg1: memref<1x16x256xf32, #tpu.memory_space<vmem>>, %arg2: memref<4x3xf32, #tpu.memory_space<smem>>, %arg3: memref<1x4xf32, #tpu.memory_space<smem>>, %arg4: memref<1x4xf32, #tpu.memory_space<smem>>, %arg5: memref<1x4xf32, #tpu.memory_space<smem>>, %arg6: memref<8x8xf32, #tpu.memory_space<smem>>, %arg7: memref<1x8xf32, #tpu.memory_space<smem>>, %arg8: memref<1x8xf32, #tpu.memory_space<smem>>, %arg9: memref<1x8xf32, #tpu.memory_space<smem>>, %arg10: memref<8x13x256xf32, #tpu.memory_space<vmem>>) attributes {dimension_semantics = [#tpu.dimension_semantics<parallel>], iteration_bounds = array<i64: 2>, scalar_prefetch = 0 : i64, scratch_operands = 0 : i64, tpu.core_type = #tpu.core_type<tc>, window_params = [{transform_indices = @transform_0, window_bounds = array<i64: 1, 16, 256>}, {transform_indices = @transform_1, window_bounds = array<i64: 4, 3>}, {transform_indices = @transform_2, window_bounds = array<i64: 1, 4>}, {transform_indices = @transform_3, window_bounds = array<i64: 1, 4>}, {transform_indices = @transform_4, window_bounds = array<i64: 1, 4>}, {transform_indices = @transform_5, window_bounds = array<i64: 8, 8>}, {transform_indices = @transform_6, window_bounds = array<i64: 1, 8>}, {transform_indices = @transform_7, window_bounds = array<i64: 1, 8>}, {transform_indices = @transform_8, window_bounds = array<i64: 1, 8>}, {transform_indices = @transform_9, window_bounds = array<i64: 8, 13, 256>}]} {
    %c0_i32 = arith.constant 0 : i32
    %c2_i32 = arith.constant 2 : i32
    %0 = arith.addi %c0_i32, %c2_i32 : i32
    %c1_i32 = arith.constant 1 : i32
    scf.for %arg11 = %c0_i32 to %0 step %c1_i32  : i32 {
      %c1_i32_1 = arith.constant 1 : i32
      %1 = arith.muli %arg11, %c1_i32_1 : i32
      %c0_i32_2 = arith.constant 0 : i32
      %2 = arith.addi %c0_i32_2, %1 : i32
      %c128_i32 = arith.constant 128 : i32
      %3 = arith.muli %2, %c128_i32 : i32
      %4 = tpu.assume_multiple %3, 128 : i32
      %c0 = arith.constant 0 : index
      %c0_3 = arith.constant 0 : index
      %5 = arith.index_cast %4 : i32 to index
      %6 = vector.load %arg1[%c0, %c0_3, %5] : memref<1x16x256xf32, #tpu.memory_space<vmem>>, vector<1x16x128xf32>
      %7 = vector.shape_cast %6 : vector<1x16x128xf32> to vector<16x128xf32>
      %c0_4 = arith.constant 0 : index
      %c0_5 = arith.constant 0 : index
      %8 = memref.load %arg2[%c0_4, %c0_5] : memref<4x3xf32, #tpu.memory_space<smem>>
      %9 = vector.extract_strided_slice %7 {offsets = [0, 0], sizes = [14, 128], strides = [1, 1]} : vector<16x128xf32> to vector<14x128xf32>
      %10 = vector.broadcast %8 : f32 to vector<14x128xf32>
      %11 = arith.mulf %10, %9 : vector<14x128xf32>
      %c0_6 = arith.constant 0 : index
      %c1 = arith.constant 1 : index
      %12 = memref.load %arg2[%c0_6, %c1] : memref<4x3xf32, #tpu.memory_space<smem>>
      %13 = vector.extract_strided_slice %7 {offsets = [1, 0], sizes = [14, 128], strides = [1, 1]} : vector<16x128xf32> to vector<14x128xf32>
      %14 = vector.broadcast %12 : f32 to vector<14x128xf32>
      %15 = arith.mulf %14, %13 : vector<14x128xf32>
      %16 = arith.addf %11, %15 : vector<14x128xf32>
      %c0_7 = arith.constant 0 : index
      %c2 = arith.constant 2 : index
      %17 = memref.load %arg2[%c0_7, %c2] : memref<4x3xf32, #tpu.memory_space<smem>>
      %18 = vector.extract_strided_slice %7 {offsets = [2, 0], sizes = [14, 128], strides = [1, 1]} : vector<16x128xf32> to vector<14x128xf32>
      %19 = vector.broadcast %17 : f32 to vector<14x128xf32>
      %20 = arith.mulf %19, %18 : vector<14x128xf32>
      %21 = arith.addf %16, %20 : vector<14x128xf32>
      %c0_8 = arith.constant 0 : index
      %c0_9 = arith.constant 0 : index
      %22 = memref.load %arg3[%c0_8, %c0_9] : memref<1x4xf32, #tpu.memory_space<smem>>
      %23 = vector.broadcast %22 : f32 to vector<14x128xf32>
      %24 = arith.addf %21, %23 : vector<14x128xf32>
      %c1_10 = arith.constant 1 : index
      %c0_11 = arith.constant 0 : index
      %25 = memref.load %arg2[%c1_10, %c0_11] : memref<4x3xf32, #tpu.memory_space<smem>>
      %26 = vector.extract_strided_slice %7 {offsets = [0, 0], sizes = [14, 128], strides = [1, 1]} : vector<16x128xf32> to vector<14x128xf32>
      %27 = vector.broadcast %25 : f32 to vector<14x128xf32>
      %28 = arith.mulf %27, %26 : vector<14x128xf32>
      %c1_12 = arith.constant 1 : index
      %c1_13 = arith.constant 1 : index
      %29 = memref.load %arg2[%c1_12, %c1_13] : memref<4x3xf32, #tpu.memory_space<smem>>
      %30 = vector.extract_strided_slice %7 {offsets = [1, 0], sizes = [14, 128], strides = [1, 1]} : vector<16x128xf32> to vector<14x128xf32>
      %31 = vector.broadcast %29 : f32 to vector<14x128xf32>
      %32 = arith.mulf %31, %30 : vector<14x128xf32>
      %33 = arith.addf %28, %32 : vector<14x128xf32>
      %c1_14 = arith.constant 1 : index
      %c2_15 = arith.constant 2 : index
      %34 = memref.load %arg2[%c1_14, %c2_15] : memref<4x3xf32, #tpu.memory_space<smem>>
      %35 = vector.extract_strided_slice %7 {offsets = [2, 0], sizes = [14, 128], strides = [1, 1]} : vector<16x128xf32> to vector<14x128xf32>
      %36 = vector.broadcast %34 : f32 to vector<14x128xf32>
      %37 = arith.mulf %36, %35 : vector<14x128xf32>
      %38 = arith.addf %33, %37 : vector<14x128xf32>
      %c0_16 = arith.constant 0 : index
      %c1_17 = arith.constant 1 : index
      %39 = memref.load %arg3[%c0_16, %c1_17] : memref<1x4xf32, #tpu.memory_space<smem>>
      %40 = vector.broadcast %39 : f32 to vector<14x128xf32>
      %41 = arith.addf %38, %40 : vector<14x128xf32>
      %c2_18 = arith.constant 2 : index
      %c0_19 = arith.constant 0 : index
      %42 = memref.load %arg2[%c2_18, %c0_19] : memref<4x3xf32, #tpu.memory_space<smem>>
      %43 = vector.extract_strided_slice %7 {offsets = [0, 0], sizes = [14, 128], strides = [1, 1]} : vector<16x128xf32> to vector<14x128xf32>
      %44 = vector.broadcast %42 : f32 to vector<14x128xf32>
      %45 = arith.mulf %44, %43 : vector<14x128xf32>
      %c2_20 = arith.constant 2 : index
      %c1_21 = arith.constant 1 : index
      %46 = memref.load %arg2[%c2_20, %c1_21] : memref<4x3xf32, #tpu.memory_space<smem>>
      %47 = vector.extract_strided_slice %7 {offsets = [1, 0], sizes = [14, 128], strides = [1, 1]} : vector<16x128xf32> to vector<14x128xf32>
      %48 = vector.broadcast %46 : f32 to vector<14x128xf32>
      %49 = arith.mulf %48, %47 : vector<14x128xf32>
      %50 = arith.addf %45, %49 : vector<14x128xf32>
      %c2_22 = arith.constant 2 : index
      %c2_23 = arith.constant 2 : index
      %51 = memref.load %arg2[%c2_22, %c2_23] : memref<4x3xf32, #tpu.memory_space<smem>>
      %52 = vector.extract_strided_slice %7 {offsets = [2, 0], sizes = [14, 128], strides = [1, 1]} : vector<16x128xf32> to vector<14x128xf32>
      %53 = vector.broadcast %51 : f32 to vector<14x128xf32>
      %54 = arith.mulf %53, %52 : vector<14x128xf32>
      %55 = arith.addf %50, %54 : vector<14x128xf32>
      %c0_24 = arith.constant 0 : index
      %c2_25 = arith.constant 2 : index
      %56 = memref.load %arg3[%c0_24, %c2_25] : memref<1x4xf32, #tpu.memory_space<smem>>
      %57 = vector.broadcast %56 : f32 to vector<14x128xf32>
      %58 = arith.addf %55, %57 : vector<14x128xf32>
      %c3 = arith.constant 3 : index
      %c0_26 = arith.constant 0 : index
      %59 = memref.load %arg2[%c3, %c0_26] : memref<4x3xf32, #tpu.memory_space<smem>>
      %60 = vector.extract_strided_slice %7 {offsets = [0, 0], sizes = [14, 128], strides = [1, 1]} : vector<16x128xf32> to vector<14x128xf32>
      %61 = vector.broadcast %59 : f32 to vector<14x128xf32>
      %62 = arith.mulf %61, %60 : vector<14x128xf32>
      %c3_27 = arith.constant 3 : index
      %c1_28 = arith.constant 1 : index
      %63 = memref.load %arg2[%c3_27, %c1_28] : memref<4x3xf32, #tpu.memory_space<smem>>
      %64 = vector.extract_strided_slice %7 {offsets = [1, 0], sizes = [14, 128], strides = [1, 1]} : vector<16x128xf32> to vector<14x128xf32>
      %65 = vector.broadcast %63 : f32 to vector<14x128xf32>
      %66 = arith.mulf %65, %64 : vector<14x128xf32>
      %67 = arith.addf %62, %66 : vector<14x128xf32>
      %c3_29 = arith.constant 3 : index
      %c2_30 = arith.constant 2 : index
      %68 = memref.load %arg2[%c3_29, %c2_30] : memref<4x3xf32, #tpu.memory_space<smem>>
      %69 = vector.extract_strided_slice %7 {offsets = [2, 0], sizes = [14, 128], strides = [1, 1]} : vector<16x128xf32> to vector<14x128xf32>
      %70 = vector.broadcast %68 : f32 to vector<14x128xf32>
      %71 = arith.mulf %70, %69 : vector<14x128xf32>
      %72 = arith.addf %67, %71 : vector<14x128xf32>
      %c0_31 = arith.constant 0 : index
      %c3_32 = arith.constant 3 : index
      %73 = memref.load %arg3[%c0_31, %c3_32] : memref<1x4xf32, #tpu.memory_space<smem>>
      %74 = vector.broadcast %73 : f32 to vector<14x128xf32>
      %75 = arith.addf %72, %74 : vector<14x128xf32>
      %cst = arith.constant dense<0.000000e+00> : vector<128xf32>
      %76 = vector.multi_reduction <add>, %24, %cst [0] : vector<14x128xf32> to vector<128xf32>
      %77 = vector.shape_cast %76 : vector<128xf32> to vector<1x128xf32>
      %cst_33 = arith.constant dense<0.000000e+00> : vector<128xf32>
      %78 = vector.multi_reduction <add>, %41, %cst_33 [0] : vector<14x128xf32> to vector<128xf32>
      %79 = vector.shape_cast %78 : vector<128xf32> to vector<1x128xf32>
      %80 = arith.addf %77, %79 : vector<1x128xf32>
      %cst_34 = arith.constant 0.0357142873 : f32
      %81 = vector.broadcast %cst_34 : f32 to vector<1x128xf32>
      %82 = arith.mulf %80, %81 : vector<1x128xf32>
      %83 = vector.broadcast %82 : vector<1x128xf32> to vector<14x128xf32>
      %84 = arith.subf %24, %83 : vector<14x128xf32>
      %85 = arith.mulf %84, %84 : vector<14x128xf32>
      %cst_35 = arith.constant dense<0.000000e+00> : vector<128xf32>
      %86 = vector.multi_reduction <add>, %85, %cst_35 [0] : vector<14x128xf32> to vector<128xf32>
      %87 = vector.shape_cast %86 : vector<128xf32> to vector<1x128xf32>
      %88 = vector.broadcast %82 : vector<1x128xf32> to vector<14x128xf32>
      %89 = arith.subf %41, %88 : vector<14x128xf32>
      %90 = arith.mulf %89, %89 : vector<14x128xf32>
      %cst_36 = arith.constant dense<0.000000e+00> : vector<128xf32>
      %91 = vector.multi_reduction <add>, %90, %cst_36 [0] : vector<14x128xf32> to vector<128xf32>
      %92 = vector.shape_cast %91 : vector<128xf32> to vector<1x128xf32>
      %93 = arith.addf %87, %92 : vector<1x128xf32>
      %cst_37 = arith.constant 0.0357142873 : f32
      %94 = vector.broadcast %cst_37 : f32 to vector<1x128xf32>
      %95 = arith.mulf %93, %94 : vector<1x128xf32>
      %cst_38 = arith.constant 9.99999974E-6 : f32
      %96 = vector.broadcast %cst_38 : f32 to vector<1x128xf32>
      %97 = arith.addf %95, %96 : vector<1x128xf32>
      %98 = math.rsqrt %97 : vector<1x128xf32>
      %c0_39 = arith.constant 0 : index
      %c0_40 = arith.constant 0 : index
      %99 = memref.load %arg4[%c0_39, %c0_40] : memref<1x4xf32, #tpu.memory_space<smem>>
      %100 = vector.broadcast %99 : f32 to vector<1x128xf32>
      %101 = arith.mulf %100, %98 : vector<1x128xf32>
      %102 = vector.broadcast %82 : vector<1x128xf32> to vector<14x128xf32>
      %103 = arith.subf %24, %102 : vector<14x128xf32>
      %104 = vector.broadcast %101 : vector<1x128xf32> to vector<14x128xf32>
      %105 = arith.mulf %103, %104 : vector<14x128xf32>
      %c0_41 = arith.constant 0 : index
      %c0_42 = arith.constant 0 : index
      %106 = memref.load %arg5[%c0_41, %c0_42] : memref<1x4xf32, #tpu.memory_space<smem>>
      %107 = vector.broadcast %106 : f32 to vector<14x128xf32>
      %108 = arith.addf %105, %107 : vector<14x128xf32>
      %cst_43 = arith.constant 0.000000e+00 : f32
      %109 = vector.broadcast %cst_43 : f32 to vector<14x128xf32>
      %110 = arith.maximumf %108, %109 : vector<14x128xf32>
      %c0_44 = arith.constant 0 : index
      %c1_45 = arith.constant 1 : index
      %111 = memref.load %arg4[%c0_44, %c1_45] : memref<1x4xf32, #tpu.memory_space<smem>>
      %112 = vector.broadcast %111 : f32 to vector<1x128xf32>
      %113 = arith.mulf %112, %98 : vector<1x128xf32>
      %114 = vector.broadcast %82 : vector<1x128xf32> to vector<14x128xf32>
      %115 = arith.subf %41, %114 : vector<14x128xf32>
      %116 = vector.broadcast %113 : vector<1x128xf32> to vector<14x128xf32>
      %117 = arith.mulf %115, %116 : vector<14x128xf32>
      %c0_46 = arith.constant 0 : index
      %c1_47 = arith.constant 1 : index
      %118 = memref.load %arg5[%c0_46, %c1_47] : memref<1x4xf32, #tpu.memory_space<smem>>
      %119 = vector.broadcast %118 : f32 to vector<14x128xf32>
      %120 = arith.addf %117, %119 : vector<14x128xf32>
      %cst_48 = arith.constant 0.000000e+00 : f32
      %121 = vector.broadcast %cst_48 : f32 to vector<14x128xf32>
      %122 = arith.maximumf %120, %121 : vector<14x128xf32>
      %cst_49 = arith.constant dense<0.000000e+00> : vector<128xf32>
      %123 = vector.multi_reduction <add>, %58, %cst_49 [0] : vector<14x128xf32> to vector<128xf32>
      %124 = vector.shape_cast %123 : vector<128xf32> to vector<1x128xf32>
      %cst_50 = arith.constant dense<0.000000e+00> : vector<128xf32>
      %125 = vector.multi_reduction <add>, %75, %cst_50 [0] : vector<14x128xf32> to vector<128xf32>
      %126 = vector.shape_cast %125 : vector<128xf32> to vector<1x128xf32>
      %127 = arith.addf %124, %126 : vector<1x128xf32>
      %cst_51 = arith.constant 0.0357142873 : f32
      %128 = vector.broadcast %cst_51 : f32 to vector<1x128xf32>
      %129 = arith.mulf %127, %128 : vector<1x128xf32>
      %130 = vector.broadcast %129 : vector<1x128xf32> to vector<14x128xf32>
      %131 = arith.subf %58, %130 : vector<14x128xf32>
      %132 = arith.mulf %131, %131 : vector<14x128xf32>
      %cst_52 = arith.constant dense<0.000000e+00> : vector<128xf32>
      %133 = vector.multi_reduction <add>, %132, %cst_52 [0] : vector<14x128xf32> to vector<128xf32>
      %134 = vector.shape_cast %133 : vector<128xf32> to vector<1x128xf32>
      %135 = vector.broadcast %129 : vector<1x128xf32> to vector<14x128xf32>
      %136 = arith.subf %75, %135 : vector<14x128xf32>
      %137 = arith.mulf %136, %136 : vector<14x128xf32>
      %cst_53 = arith.constant dense<0.000000e+00> : vector<128xf32>
      %138 = vector.multi_reduction <add>, %137, %cst_53 [0] : vector<14x128xf32> to vector<128xf32>
      %139 = vector.shape_cast %138 : vector<128xf32> to vector<1x128xf32>
      %140 = arith.addf %134, %139 : vector<1x128xf32>
      %cst_54 = arith.constant 0.0357142873 : f32
      %141 = vector.broadcast %cst_54 : f32 to vector<1x128xf32>
      %142 = arith.mulf %140, %141 : vector<1x128xf32>
      %cst_55 = arith.constant 9.99999974E-6 : f32
      %143 = vector.broadcast %cst_55 : f32 to vector<1x128xf32>
      %144 = arith.addf %142, %143 : vector<1x128xf32>
      %145 = math.rsqrt %144 : vector<1x128xf32>
      %c0_56 = arith.constant 0 : index
      %c2_57 = arith.constant 2 : index
      %146 = memref.load %arg4[%c0_56, %c2_57] : memref<1x4xf32, #tpu.memory_space<smem>>
      %147 = vector.broadcast %146 : f32 to vector<1x128xf32>
      %148 = arith.mulf %147, %145 : vector<1x128xf32>
      %149 = vector.broadcast %129 : vector<1x128xf32> to vector<14x128xf32>
      %150 = arith.subf %58, %149 : vector<14x128xf32>
      %151 = vector.broadcast %148 : vector<1x128xf32> to vector<14x128xf32>
      %152 = arith.mulf %150, %151 : vector<14x128xf32>
      %c0_58 = arith.constant 0 : index
      %c2_59 = arith.constant 2 : index
      %153 = memref.load %arg5[%c0_58, %c2_59] : memref<1x4xf32, #tpu.memory_space<smem>>
      %154 = vector.broadcast %153 : f32 to vector<14x128xf32>
      %155 = arith.addf %152, %154 : vector<14x128xf32>
      %cst_60 = arith.constant 0.000000e+00 : f32
      %156 = vector.broadcast %cst_60 : f32 to vector<14x128xf32>
      %157 = arith.maximumf %155, %156 : vector<14x128xf32>
      %c0_61 = arith.constant 0 : index
      %c3_62 = arith.constant 3 : index
      %158 = memref.load %arg4[%c0_61, %c3_62] : memref<1x4xf32, #tpu.memory_space<smem>>
      %159 = vector.broadcast %158 : f32 to vector<1x128xf32>
      %160 = arith.mulf %159, %145 : vector<1x128xf32>
      %161 = vector.broadcast %129 : vector<1x128xf32> to vector<14x128xf32>
      %162 = arith.subf %75, %161 : vector<14x128xf32>
      %163 = vector.broadcast %160 : vector<1x128xf32> to vector<14x128xf32>
      %164 = arith.mulf %162, %163 : vector<14x128xf32>
      %c0_63 = arith.constant 0 : index
      %c3_64 = arith.constant 3 : index
      %165 = memref.load %arg5[%c0_63, %c3_64] : memref<1x4xf32, #tpu.memory_space<smem>>
      %166 = vector.broadcast %165 : f32 to vector<14x128xf32>
      %167 = arith.addf %164, %166 : vector<14x128xf32>
      %cst_65 = arith.constant 0.000000e+00 : f32
      %168 = vector.broadcast %cst_65 : f32 to vector<14x128xf32>
      %169 = arith.maximumf %167, %168 : vector<14x128xf32>
      %c0_66 = arith.constant 0 : index
      %c0_67 = arith.constant 0 : index
      %170 = memref.load %arg6[%c0_66, %c0_67] : memref<8x8xf32, #tpu.memory_space<smem>>
      %171 = vector.extract_strided_slice %110 {offsets = [0, 0], sizes = [13, 128], strides = [1, 1]} : vector<14x128xf32> to vector<13x128xf32>
      %172 = vector.broadcast %170 : f32 to vector<13x128xf32>
      %173 = arith.mulf %172, %171 : vector<13x128xf32>
      %c0_68 = arith.constant 0 : index
      %c1_69 = arith.constant 1 : index
      %174 = memref.load %arg6[%c0_68, %c1_69] : memref<8x8xf32, #tpu.memory_space<smem>>
      %175 = vector.extract_strided_slice %110 {offsets = [1, 0], sizes = [13, 128], strides = [1, 1]} : vector<14x128xf32> to vector<13x128xf32>
      %176 = vector.broadcast %174 : f32 to vector<13x128xf32>
      %177 = arith.mulf %176, %175 : vector<13x128xf32>
      %178 = arith.addf %173, %177 : vector<13x128xf32>
      %c0_70 = arith.constant 0 : index
      %c2_71 = arith.constant 2 : index
      %179 = memref.load %arg6[%c0_70, %c2_71] : memref<8x8xf32, #tpu.memory_space<smem>>
      %180 = vector.extract_strided_slice %122 {offsets = [0, 0], sizes = [13, 128], strides = [1, 1]} : vector<14x128xf32> to vector<13x128xf32>
      %181 = vector.broadcast %179 : f32 to vector<13x128xf32>
      %182 = arith.mulf %181, %180 : vector<13x128xf32>
      %183 = arith.addf %178, %182 : vector<13x128xf32>
      %c0_72 = arith.constant 0 : index
      %c3_73 = arith.constant 3 : index
      %184 = memref.load %arg6[%c0_72, %c3_73] : memref<8x8xf32, #tpu.memory_space<smem>>
      %185 = vector.extract_strided_slice %122 {offsets = [1, 0], sizes = [13, 128], strides = [1, 1]} : vector<14x128xf32> to vector<13x128xf32>
      %186 = vector.broadcast %184 : f32 to vector<13x128xf32>
      %187 = arith.mulf %186, %185 : vector<13x128xf32>
      %188 = arith.addf %183, %187 : vector<13x128xf32>
      %c0_74 = arith.constant 0 : index
      %c4 = arith.constant 4 : index
      %189 = memref.load %arg6[%c0_74, %c4] : memref<8x8xf32, #tpu.memory_space<smem>>
      %190 = vector.extract_strided_slice %157 {offsets = [0, 0], sizes = [13, 128], strides = [1, 1]} : vector<14x128xf32> to vector<13x128xf32>
      %191 = vector.broadcast %189 : f32 to vector<13x128xf32>
      %192 = arith.mulf %191, %190 : vector<13x128xf32>
      %193 = arith.addf %188, %192 : vector<13x128xf32>
      %c0_75 = arith.constant 0 : index
      %c5 = arith.constant 5 : index
      %194 = memref.load %arg6[%c0_75, %c5] : memref<8x8xf32, #tpu.memory_space<smem>>
      %195 = vector.extract_strided_slice %157 {offsets = [1, 0], sizes = [13, 128], strides = [1, 1]} : vector<14x128xf32> to vector<13x128xf32>
      %196 = vector.broadcast %194 : f32 to vector<13x128xf32>
      %197 = arith.mulf %196, %195 : vector<13x128xf32>
      %198 = arith.addf %193, %197 : vector<13x128xf32>
      %c0_76 = arith.constant 0 : index
      %c6 = arith.constant 6 : index
      %199 = memref.load %arg6[%c0_76, %c6] : memref<8x8xf32, #tpu.memory_space<smem>>
      %200 = vector.extract_strided_slice %169 {offsets = [0, 0], sizes = [13, 128], strides = [1, 1]} : vector<14x128xf32> to vector<13x128xf32>
      %201 = vector.broadcast %199 : f32 to vector<13x128xf32>
      %202 = arith.mulf %201, %200 : vector<13x128xf32>
      %203 = arith.addf %198, %202 : vector<13x128xf32>
      %c0_77 = arith.constant 0 : index
      %c7 = arith.constant 7 : index
      %204 = memref.load %arg6[%c0_77, %c7] : memref<8x8xf32, #tpu.memory_space<smem>>
      %205 = vector.extract_strided_slice %169 {offsets = [1, 0], sizes = [13, 128], strides = [1, 1]} : vector<14x128xf32> to vector<13x128xf32>
      %206 = vector.broadcast %204 : f32 to vector<13x128xf32>
      %207 = arith.mulf %206, %205 : vector<13x128xf32>
      %208 = arith.addf %203, %207 : vector<13x128xf32>
      %c0_78 = arith.constant 0 : index
      %c0_79 = arith.constant 0 : index
      %209 = memref.load %arg7[%c0_78, %c0_79] : memref<1x8xf32, #tpu.memory_space<smem>>
      %210 = vector.broadcast %209 : f32 to vector<13x128xf32>
      %211 = arith.addf %208, %210 : vector<13x128xf32>
      %c1_80 = arith.constant 1 : index
      %c0_81 = arith.constant 0 : index
      %212 = memref.load %arg6[%c1_80, %c0_81] : memref<8x8xf32, #tpu.memory_space<smem>>
      %213 = vector.extract_strided_slice %110 {offsets = [0, 0], sizes = [13, 128], strides = [1, 1]} : vector<14x128xf32> to vector<13x128xf32>
      %214 = vector.broadcast %212 : f32 to vector<13x128xf32>
      %215 = arith.mulf %214, %213 : vector<13x128xf32>
      %c1_82 = arith.constant 1 : index
      %c1_83 = arith.constant 1 : index
      %216 = memref.load %arg6[%c1_82, %c1_83] : memref<8x8xf32, #tpu.memory_space<smem>>
      %217 = vector.extract_strided_slice %110 {offsets = [1, 0], sizes = [13, 128], strides = [1, 1]} : vector<14x128xf32> to vector<13x128xf32>
      %218 = vector.broadcast %216 : f32 to vector<13x128xf32>
      %219 = arith.mulf %218, %217 : vector<13x128xf32>
      %220 = arith.addf %215, %219 : vector<13x128xf32>
      %c1_84 = arith.constant 1 : index
      %c2_85 = arith.constant 2 : index
      %221 = memref.load %arg6[%c1_84, %c2_85] : memref<8x8xf32, #tpu.memory_space<smem>>
      %222 = vector.extract_strided_slice %122 {offsets = [0, 0], sizes = [13, 128], strides = [1, 1]} : vector<14x128xf32> to vector<13x128xf32>
      %223 = vector.broadcast %221 : f32 to vector<13x128xf32>
      %224 = arith.mulf %223, %222 : vector<13x128xf32>
      %225 = arith.addf %220, %224 : vector<13x128xf32>
      %c1_86 = arith.constant 1 : index
      %c3_87 = arith.constant 3 : index
      %226 = memref.load %arg6[%c1_86, %c3_87] : memref<8x8xf32, #tpu.memory_space<smem>>
      %227 = vector.extract_strided_slice %122 {offsets = [1, 0], sizes = [13, 128], strides = [1, 1]} : vector<14x128xf32> to vector<13x128xf32>
      %228 = vector.broadcast %226 : f32 to vector<13x128xf32>
      %229 = arith.mulf %228, %227 : vector<13x128xf32>
      %230 = arith.addf %225, %229 : vector<13x128xf32>
      %c1_88 = arith.constant 1 : index
      %c4_89 = arith.constant 4 : index
      %231 = memref.load %arg6[%c1_88, %c4_89] : memref<8x8xf32, #tpu.memory_space<smem>>
      %232 = vector.extract_strided_slice %157 {offsets = [0, 0], sizes = [13, 128], strides = [1, 1]} : vector<14x128xf32> to vector<13x128xf32>
      %233 = vector.broadcast %231 : f32 to vector<13x128xf32>
      %234 = arith.mulf %233, %232 : vector<13x128xf32>
      %235 = arith.addf %230, %234 : vector<13x128xf32>
      %c1_90 = arith.constant 1 : index
      %c5_91 = arith.constant 5 : index
      %236 = memref.load %arg6[%c1_90, %c5_91] : memref<8x8xf32, #tpu.memory_space<smem>>
      %237 = vector.extract_strided_slice %157 {offsets = [1, 0], sizes = [13, 128], strides = [1, 1]} : vector<14x128xf32> to vector<13x128xf32>
      %238 = vector.broadcast %236 : f32 to vector<13x128xf32>
      %239 = arith.mulf %238, %237 : vector<13x128xf32>
      %240 = arith.addf %235, %239 : vector<13x128xf32>
      %c1_92 = arith.constant 1 : index
      %c6_93 = arith.constant 6 : index
      %241 = memref.load %arg6[%c1_92, %c6_93] : memref<8x8xf32, #tpu.memory_space<smem>>
      %242 = vector.extract_strided_slice %169 {offsets = [0, 0], sizes = [13, 128], strides = [1, 1]} : vector<14x128xf32> to vector<13x128xf32>
      %243 = vector.broadcast %241 : f32 to vector<13x128xf32>
      %244 = arith.mulf %243, %242 : vector<13x128xf32>
      %245 = arith.addf %240, %244 : vector<13x128xf32>
      %c1_94 = arith.constant 1 : index
      %c7_95 = arith.constant 7 : index
      %246 = memref.load %arg6[%c1_94, %c7_95] : memref<8x8xf32, #tpu.memory_space<smem>>
      %247 = vector.extract_strided_slice %169 {offsets = [1, 0], sizes = [13, 128], strides = [1, 1]} : vector<14x128xf32> to vector<13x128xf32>
      %248 = vector.broadcast %246 : f32 to vector<13x128xf32>
      %249 = arith.mulf %248, %247 : vector<13x128xf32>
      %250 = arith.addf %245, %249 : vector<13x128xf32>
      %c0_96 = arith.constant 0 : index
      %c1_97 = arith.constant 1 : index
      %251 = memref.load %arg7[%c0_96, %c1_97] : memref<1x8xf32, #tpu.memory_space<smem>>
      %252 = vector.broadcast %251 : f32 to vector<13x128xf32>
      %253 = arith.addf %250, %252 : vector<13x128xf32>
      %c2_98 = arith.constant 2 : index
      %c0_99 = arith.constant 0 : index
      %254 = memref.load %arg6[%c2_98, %c0_99] : memref<8x8xf32, #tpu.memory_space<smem>>
      %255 = vector.extract_strided_slice %110 {offsets = [0, 0], sizes = [13, 128], strides = [1, 1]} : vector<14x128xf32> to vector<13x128xf32>
      %256 = vector.broadcast %254 : f32 to vector<13x128xf32>
      %257 = arith.mulf %256, %255 : vector<13x128xf32>
      %c2_100 = arith.constant 2 : index
      %c1_101 = arith.constant 1 : index
      %258 = memref.load %arg6[%c2_100, %c1_101] : memref<8x8xf32, #tpu.memory_space<smem>>
      %259 = vector.extract_strided_slice %110 {offsets = [1, 0], sizes = [13, 128], strides = [1, 1]} : vector<14x128xf32> to vector<13x128xf32>
      %260 = vector.broadcast %258 : f32 to vector<13x128xf32>
      %261 = arith.mulf %260, %259 : vector<13x128xf32>
      %262 = arith.addf %257, %261 : vector<13x128xf32>
      %c2_102 = arith.constant 2 : index
      %c2_103 = arith.constant 2 : index
      %263 = memref.load %arg6[%c2_102, %c2_103] : memref<8x8xf32, #tpu.memory_space<smem>>
      %264 = vector.extract_strided_slice %122 {offsets = [0, 0], sizes = [13, 128], strides = [1, 1]} : vector<14x128xf32> to vector<13x128xf32>
      %265 = vector.broadcast %263 : f32 to vector<13x128xf32>
      %266 = arith.mulf %265, %264 : vector<13x128xf32>
      %267 = arith.addf %262, %266 : vector<13x128xf32>
      %c2_104 = arith.constant 2 : index
      %c3_105 = arith.constant 3 : index
      %268 = memref.load %arg6[%c2_104, %c3_105] : memref<8x8xf32, #tpu.memory_space<smem>>
      %269 = vector.extract_strided_slice %122 {offsets = [1, 0], sizes = [13, 128], strides = [1, 1]} : vector<14x128xf32> to vector<13x128xf32>
      %270 = vector.broadcast %268 : f32 to vector<13x128xf32>
      %271 = arith.mulf %270, %269 : vector<13x128xf32>
      %272 = arith.addf %267, %271 : vector<13x128xf32>
      %c2_106 = arith.constant 2 : index
      %c4_107 = arith.constant 4 : index
      %273 = memref.load %arg6[%c2_106, %c4_107] : memref<8x8xf32, #tpu.memory_space<smem>>
      %274 = vector.extract_strided_slice %157 {offsets = [0, 0], sizes = [13, 128], strides = [1, 1]} : vector<14x128xf32> to vector<13x128xf32>
      %275 = vector.broadcast %273 : f32 to vector<13x128xf32>
      %276 = arith.mulf %275, %274 : vector<13x128xf32>
      %277 = arith.addf %272, %276 : vector<13x128xf32>
      %c2_108 = arith.constant 2 : index
      %c5_109 = arith.constant 5 : index
      %278 = memref.load %arg6[%c2_108, %c5_109] : memref<8x8xf32, #tpu.memory_space<smem>>
      %279 = vector.extract_strided_slice %157 {offsets = [1, 0], sizes = [13, 128], strides = [1, 1]} : vector<14x128xf32> to vector<13x128xf32>
      %280 = vector.broadcast %278 : f32 to vector<13x128xf32>
      %281 = arith.mulf %280, %279 : vector<13x128xf32>
      %282 = arith.addf %277, %281 : vector<13x128xf32>
      %c2_110 = arith.constant 2 : index
      %c6_111 = arith.constant 6 : index
      %283 = memref.load %arg6[%c2_110, %c6_111] : memref<8x8xf32, #tpu.memory_space<smem>>
      %284 = vector.extract_strided_slice %169 {offsets = [0, 0], sizes = [13, 128], strides = [1, 1]} : vector<14x128xf32> to vector<13x128xf32>
      %285 = vector.broadcast %283 : f32 to vector<13x128xf32>
      %286 = arith.mulf %285, %284 : vector<13x128xf32>
      %287 = arith.addf %282, %286 : vector<13x128xf32>
      %c2_112 = arith.constant 2 : index
      %c7_113 = arith.constant 7 : index
      %288 = memref.load %arg6[%c2_112, %c7_113] : memref<8x8xf32, #tpu.memory_space<smem>>
      %289 = vector.extract_strided_slice %169 {offsets = [1, 0], sizes = [13, 128], strides = [1, 1]} : vector<14x128xf32> to vector<13x128xf32>
      %290 = vector.broadcast %288 : f32 to vector<13x128xf32>
      %291 = arith.mulf %290, %289 : vector<13x128xf32>
      %292 = arith.addf %287, %291 : vector<13x128xf32>
      %c0_114 = arith.constant 0 : index
      %c2_115 = arith.constant 2 : index
      %293 = memref.load %arg7[%c0_114, %c2_115] : memref<1x8xf32, #tpu.memory_space<smem>>
      %294 = vector.broadcast %293 : f32 to vector<13x128xf32>
      %295 = arith.addf %292, %294 : vector<13x128xf32>
      %c3_116 = arith.constant 3 : index
      %c0_117 = arith.constant 0 : index
      %296 = memref.load %arg6[%c3_116, %c0_117] : memref<8x8xf32, #tpu.memory_space<smem>>
      %297 = vector.extract_strided_slice %110 {offsets = [0, 0], sizes = [13, 128], strides = [1, 1]} : vector<14x128xf32> to vector<13x128xf32>
      %298 = vector.broadcast %296 : f32 to vector<13x128xf32>
      %299 = arith.mulf %298, %297 : vector<13x128xf32>
      %c3_118 = arith.constant 3 : index
      %c1_119 = arith.constant 1 : index
      %300 = memref.load %arg6[%c3_118, %c1_119] : memref<8x8xf32, #tpu.memory_space<smem>>
      %301 = vector.extract_strided_slice %110 {offsets = [1, 0], sizes = [13, 128], strides = [1, 1]} : vector<14x128xf32> to vector<13x128xf32>
      %302 = vector.broadcast %300 : f32 to vector<13x128xf32>
      %303 = arith.mulf %302, %301 : vector<13x128xf32>
      %304 = arith.addf %299, %303 : vector<13x128xf32>
      %c3_120 = arith.constant 3 : index
      %c2_121 = arith.constant 2 : index
      %305 = memref.load %arg6[%c3_120, %c2_121] : memref<8x8xf32, #tpu.memory_space<smem>>
      %306 = vector.extract_strided_slice %122 {offsets = [0, 0], sizes = [13, 128], strides = [1, 1]} : vector<14x128xf32> to vector<13x128xf32>
      %307 = vector.broadcast %305 : f32 to vector<13x128xf32>
      %308 = arith.mulf %307, %306 : vector<13x128xf32>
      %309 = arith.addf %304, %308 : vector<13x128xf32>
      %c3_122 = arith.constant 3 : index
      %c3_123 = arith.constant 3 : index
      %310 = memref.load %arg6[%c3_122, %c3_123] : memref<8x8xf32, #tpu.memory_space<smem>>
      %311 = vector.extract_strided_slice %122 {offsets = [1, 0], sizes = [13, 128], strides = [1, 1]} : vector<14x128xf32> to vector<13x128xf32>
      %312 = vector.broadcast %310 : f32 to vector<13x128xf32>
      %313 = arith.mulf %312, %311 : vector<13x128xf32>
      %314 = arith.addf %309, %313 : vector<13x128xf32>
      %c3_124 = arith.constant 3 : index
      %c4_125 = arith.constant 4 : index
      %315 = memref.load %arg6[%c3_124, %c4_125] : memref<8x8xf32, #tpu.memory_space<smem>>
      %316 = vector.extract_strided_slice %157 {offsets = [0, 0], sizes = [13, 128], strides = [1, 1]} : vector<14x128xf32> to vector<13x128xf32>
      %317 = vector.broadcast %315 : f32 to vector<13x128xf32>
      %318 = arith.mulf %317, %316 : vector<13x128xf32>
      %319 = arith.addf %314, %318 : vector<13x128xf32>
      %c3_126 = arith.constant 3 : index
      %c5_127 = arith.constant 5 : index
      %320 = memref.load %arg6[%c3_126, %c5_127] : memref<8x8xf32, #tpu.memory_space<smem>>
      %321 = vector.extract_strided_slice %157 {offsets = [1, 0], sizes = [13, 128], strides = [1, 1]} : vector<14x128xf32> to vector<13x128xf32>
      %322 = vector.broadcast %320 : f32 to vector<13x128xf32>
      %323 = arith.mulf %322, %321 : vector<13x128xf32>
      %324 = arith.addf %319, %323 : vector<13x128xf32>
      %c3_128 = arith.constant 3 : index
      %c6_129 = arith.constant 6 : index
      %325 = memref.load %arg6[%c3_128, %c6_129] : memref<8x8xf32, #tpu.memory_space<smem>>
      %326 = vector.extract_strided_slice %169 {offsets = [0, 0], sizes = [13, 128], strides = [1, 1]} : vector<14x128xf32> to vector<13x128xf32>
      %327 = vector.broadcast %325 : f32 to vector<13x128xf32>
      %328 = arith.mulf %327, %326 : vector<13x128xf32>
      %329 = arith.addf %324, %328 : vector<13x128xf32>
      %c3_130 = arith.constant 3 : index
      %c7_131 = arith.constant 7 : index
      %330 = memref.load %arg6[%c3_130, %c7_131] : memref<8x8xf32, #tpu.memory_space<smem>>
      %331 = vector.extract_strided_slice %169 {offsets = [1, 0], sizes = [13, 128], strides = [1, 1]} : vector<14x128xf32> to vector<13x128xf32>
      %332 = vector.broadcast %330 : f32 to vector<13x128xf32>
      %333 = arith.mulf %332, %331 : vector<13x128xf32>
      %334 = arith.addf %329, %333 : vector<13x128xf32>
      %c0_132 = arith.constant 0 : index
      %c3_133 = arith.constant 3 : index
      %335 = memref.load %arg7[%c0_132, %c3_133] : memref<1x8xf32, #tpu.memory_space<smem>>
      %336 = vector.broadcast %335 : f32 to vector<13x128xf32>
      %337 = arith.addf %334, %336 : vector<13x128xf32>
      %c4_134 = arith.constant 4 : index
      %c0_135 = arith.constant 0 : index
      %338 = memref.load %arg6[%c4_134, %c0_135] : memref<8x8xf32, #tpu.memory_space<smem>>
      %339 = vector.extract_strided_slice %110 {offsets = [0, 0], sizes = [13, 128], strides = [1, 1]} : vector<14x128xf32> to vector<13x128xf32>
      %340 = vector.broadcast %338 : f32 to vector<13x128xf32>
      %341 = arith.mulf %340, %339 : vector<13x128xf32>
      %c4_136 = arith.constant 4 : index
      %c1_137 = arith.constant 1 : index
      %342 = memref.load %arg6[%c4_136, %c1_137] : memref<8x8xf32, #tpu.memory_space<smem>>
      %343 = vector.extract_strided_slice %110 {offsets = [1, 0], sizes = [13, 128], strides = [1, 1]} : vector<14x128xf32> to vector<13x128xf32>
      %344 = vector.broadcast %342 : f32 to vector<13x128xf32>
      %345 = arith.mulf %344, %343 : vector<13x128xf32>
      %346 = arith.addf %341, %345 : vector<13x128xf32>
      %c4_138 = arith.constant 4 : index
      %c2_139 = arith.constant 2 : index
      %347 = memref.load %arg6[%c4_138, %c2_139] : memref<8x8xf32, #tpu.memory_space<smem>>
      %348 = vector.extract_strided_slice %122 {offsets = [0, 0], sizes = [13, 128], strides = [1, 1]} : vector<14x128xf32> to vector<13x128xf32>
      %349 = vector.broadcast %347 : f32 to vector<13x128xf32>
      %350 = arith.mulf %349, %348 : vector<13x128xf32>
      %351 = arith.addf %346, %350 : vector<13x128xf32>
      %c4_140 = arith.constant 4 : index
      %c3_141 = arith.constant 3 : index
      %352 = memref.load %arg6[%c4_140, %c3_141] : memref<8x8xf32, #tpu.memory_space<smem>>
      %353 = vector.extract_strided_slice %122 {offsets = [1, 0], sizes = [13, 128], strides = [1, 1]} : vector<14x128xf32> to vector<13x128xf32>
      %354 = vector.broadcast %352 : f32 to vector<13x128xf32>
      %355 = arith.mulf %354, %353 : vector<13x128xf32>
      %356 = arith.addf %351, %355 : vector<13x128xf32>
      %c4_142 = arith.constant 4 : index
      %c4_143 = arith.constant 4 : index
      %357 = memref.load %arg6[%c4_142, %c4_143] : memref<8x8xf32, #tpu.memory_space<smem>>
      %358 = vector.extract_strided_slice %157 {offsets = [0, 0], sizes = [13, 128], strides = [1, 1]} : vector<14x128xf32> to vector<13x128xf32>
      %359 = vector.broadcast %357 : f32 to vector<13x128xf32>
      %360 = arith.mulf %359, %358 : vector<13x128xf32>
      %361 = arith.addf %356, %360 : vector<13x128xf32>
      %c4_144 = arith.constant 4 : index
      %c5_145 = arith.constant 5 : index
      %362 = memref.load %arg6[%c4_144, %c5_145] : memref<8x8xf32, #tpu.memory_space<smem>>
      %363 = vector.extract_strided_slice %157 {offsets = [1, 0], sizes = [13, 128], strides = [1, 1]} : vector<14x128xf32> to vector<13x128xf32>
      %364 = vector.broadcast %362 : f32 to vector<13x128xf32>
      %365 = arith.mulf %364, %363 : vector<13x128xf32>
      %366 = arith.addf %361, %365 : vector<13x128xf32>
      %c4_146 = arith.constant 4 : index
      %c6_147 = arith.constant 6 : index
      %367 = memref.load %arg6[%c4_146, %c6_147] : memref<8x8xf32, #tpu.memory_space<smem>>
      %368 = vector.extract_strided_slice %169 {offsets = [0, 0], sizes = [13, 128], strides = [1, 1]} : vector<14x128xf32> to vector<13x128xf32>
      %369 = vector.broadcast %367 : f32 to vector<13x128xf32>
      %370 = arith.mulf %369, %368 : vector<13x128xf32>
      %371 = arith.addf %366, %370 : vector<13x128xf32>
      %c4_148 = arith.constant 4 : index
      %c7_149 = arith.constant 7 : index
      %372 = memref.load %arg6[%c4_148, %c7_149] : memref<8x8xf32, #tpu.memory_space<smem>>
      %373 = vector.extract_strided_slice %169 {offsets = [1, 0], sizes = [13, 128], strides = [1, 1]} : vector<14x128xf32> to vector<13x128xf32>
      %374 = vector.broadcast %372 : f32 to vector<13x128xf32>
      %375 = arith.mulf %374, %373 : vector<13x128xf32>
      %376 = arith.addf %371, %375 : vector<13x128xf32>
      %c0_150 = arith.constant 0 : index
      %c4_151 = arith.constant 4 : index
      %377 = memref.load %arg7[%c0_150, %c4_151] : memref<1x8xf32, #tpu.memory_space<smem>>
      %378 = vector.broadcast %377 : f32 to vector<13x128xf32>
      %379 = arith.addf %376, %378 : vector<13x128xf32>
      %c5_152 = arith.constant 5 : index
      %c0_153 = arith.constant 0 : index
      %380 = memref.load %arg6[%c5_152, %c0_153] : memref<8x8xf32, #tpu.memory_space<smem>>
      %381 = vector.extract_strided_slice %110 {offsets = [0, 0], sizes = [13, 128], strides = [1, 1]} : vector<14x128xf32> to vector<13x128xf32>
      %382 = vector.broadcast %380 : f32 to vector<13x128xf32>
      %383 = arith.mulf %382, %381 : vector<13x128xf32>
      %c5_154 = arith.constant 5 : index
      %c1_155 = arith.constant 1 : index
      %384 = memref.load %arg6[%c5_154, %c1_155] : memref<8x8xf32, #tpu.memory_space<smem>>
      %385 = vector.extract_strided_slice %110 {offsets = [1, 0], sizes = [13, 128], strides = [1, 1]} : vector<14x128xf32> to vector<13x128xf32>
      %386 = vector.broadcast %384 : f32 to vector<13x128xf32>
      %387 = arith.mulf %386, %385 : vector<13x128xf32>
      %388 = arith.addf %383, %387 : vector<13x128xf32>
      %c5_156 = arith.constant 5 : index
      %c2_157 = arith.constant 2 : index
      %389 = memref.load %arg6[%c5_156, %c2_157] : memref<8x8xf32, #tpu.memory_space<smem>>
      %390 = vector.extract_strided_slice %122 {offsets = [0, 0], sizes = [13, 128], strides = [1, 1]} : vector<14x128xf32> to vector<13x128xf32>
      %391 = vector.broadcast %389 : f32 to vector<13x128xf32>
      %392 = arith.mulf %391, %390 : vector<13x128xf32>
      %393 = arith.addf %388, %392 : vector<13x128xf32>
      %c5_158 = arith.constant 5 : index
      %c3_159 = arith.constant 3 : index
      %394 = memref.load %arg6[%c5_158, %c3_159] : memref<8x8xf32, #tpu.memory_space<smem>>
      %395 = vector.extract_strided_slice %122 {offsets = [1, 0], sizes = [13, 128], strides = [1, 1]} : vector<14x128xf32> to vector<13x128xf32>
      %396 = vector.broadcast %394 : f32 to vector<13x128xf32>
      %397 = arith.mulf %396, %395 : vector<13x128xf32>
      %398 = arith.addf %393, %397 : vector<13x128xf32>
      %c5_160 = arith.constant 5 : index
      %c4_161 = arith.constant 4 : index
      %399 = memref.load %arg6[%c5_160, %c4_161] : memref<8x8xf32, #tpu.memory_space<smem>>
      %400 = vector.extract_strided_slice %157 {offsets = [0, 0], sizes = [13, 128], strides = [1, 1]} : vector<14x128xf32> to vector<13x128xf32>
      %401 = vector.broadcast %399 : f32 to vector<13x128xf32>
      %402 = arith.mulf %401, %400 : vector<13x128xf32>
      %403 = arith.addf %398, %402 : vector<13x128xf32>
      %c5_162 = arith.constant 5 : index
      %c5_163 = arith.constant 5 : index
      %404 = memref.load %arg6[%c5_162, %c5_163] : memref<8x8xf32, #tpu.memory_space<smem>>
      %405 = vector.extract_strided_slice %157 {offsets = [1, 0], sizes = [13, 128], strides = [1, 1]} : vector<14x128xf32> to vector<13x128xf32>
      %406 = vector.broadcast %404 : f32 to vector<13x128xf32>
      %407 = arith.mulf %406, %405 : vector<13x128xf32>
      %408 = arith.addf %403, %407 : vector<13x128xf32>
      %c5_164 = arith.constant 5 : index
      %c6_165 = arith.constant 6 : index
      %409 = memref.load %arg6[%c5_164, %c6_165] : memref<8x8xf32, #tpu.memory_space<smem>>
      %410 = vector.extract_strided_slice %169 {offsets = [0, 0], sizes = [13, 128], strides = [1, 1]} : vector<14x128xf32> to vector<13x128xf32>
      %411 = vector.broadcast %409 : f32 to vector<13x128xf32>
      %412 = arith.mulf %411, %410 : vector<13x128xf32>
      %413 = arith.addf %408, %412 : vector<13x128xf32>
      %c5_166 = arith.constant 5 : index
      %c7_167 = arith.constant 7 : index
      %414 = memref.load %arg6[%c5_166, %c7_167] : memref<8x8xf32, #tpu.memory_space<smem>>
      %415 = vector.extract_strided_slice %169 {offsets = [1, 0], sizes = [13, 128], strides = [1, 1]} : vector<14x128xf32> to vector<13x128xf32>
      %416 = vector.broadcast %414 : f32 to vector<13x128xf32>
      %417 = arith.mulf %416, %415 : vector<13x128xf32>
      %418 = arith.addf %413, %417 : vector<13x128xf32>
      %c0_168 = arith.constant 0 : index
      %c5_169 = arith.constant 5 : index
      %419 = memref.load %arg7[%c0_168, %c5_169] : memref<1x8xf32, #tpu.memory_space<smem>>
      %420 = vector.broadcast %419 : f32 to vector<13x128xf32>
      %421 = arith.addf %418, %420 : vector<13x128xf32>
      %c6_170 = arith.constant 6 : index
      %c0_171 = arith.constant 0 : index
      %422 = memref.load %arg6[%c6_170, %c0_171] : memref<8x8xf32, #tpu.memory_space<smem>>
      %423 = vector.extract_strided_slice %110 {offsets = [0, 0], sizes = [13, 128], strides = [1, 1]} : vector<14x128xf32> to vector<13x128xf32>
      %424 = vector.broadcast %422 : f32 to vector<13x128xf32>
      %425 = arith.mulf %424, %423 : vector<13x128xf32>
      %c6_172 = arith.constant 6 : index
      %c1_173 = arith.constant 1 : index
      %426 = memref.load %arg6[%c6_172, %c1_173] : memref<8x8xf32, #tpu.memory_space<smem>>
      %427 = vector.extract_strided_slice %110 {offsets = [1, 0], sizes = [13, 128], strides = [1, 1]} : vector<14x128xf32> to vector<13x128xf32>
      %428 = vector.broadcast %426 : f32 to vector<13x128xf32>
      %429 = arith.mulf %428, %427 : vector<13x128xf32>
      %430 = arith.addf %425, %429 : vector<13x128xf32>
      %c6_174 = arith.constant 6 : index
      %c2_175 = arith.constant 2 : index
      %431 = memref.load %arg6[%c6_174, %c2_175] : memref<8x8xf32, #tpu.memory_space<smem>>
      %432 = vector.extract_strided_slice %122 {offsets = [0, 0], sizes = [13, 128], strides = [1, 1]} : vector<14x128xf32> to vector<13x128xf32>
      %433 = vector.broadcast %431 : f32 to vector<13x128xf32>
      %434 = arith.mulf %433, %432 : vector<13x128xf32>
      %435 = arith.addf %430, %434 : vector<13x128xf32>
      %c6_176 = arith.constant 6 : index
      %c3_177 = arith.constant 3 : index
      %436 = memref.load %arg6[%c6_176, %c3_177] : memref<8x8xf32, #tpu.memory_space<smem>>
      %437 = vector.extract_strided_slice %122 {offsets = [1, 0], sizes = [13, 128], strides = [1, 1]} : vector<14x128xf32> to vector<13x128xf32>
      %438 = vector.broadcast %436 : f32 to vector<13x128xf32>
      %439 = arith.mulf %438, %437 : vector<13x128xf32>
      %440 = arith.addf %435, %439 : vector<13x128xf32>
      %c6_178 = arith.constant 6 : index
      %c4_179 = arith.constant 4 : index
      %441 = memref.load %arg6[%c6_178, %c4_179] : memref<8x8xf32, #tpu.memory_space<smem>>
      %442 = vector.extract_strided_slice %157 {offsets = [0, 0], sizes = [13, 128], strides = [1, 1]} : vector<14x128xf32> to vector<13x128xf32>
      %443 = vector.broadcast %441 : f32 to vector<13x128xf32>
      %444 = arith.mulf %443, %442 : vector<13x128xf32>
      %445 = arith.addf %440, %444 : vector<13x128xf32>
      %c6_180 = arith.constant 6 : index
      %c5_181 = arith.constant 5 : index
      %446 = memref.load %arg6[%c6_180, %c5_181] : memref<8x8xf32, #tpu.memory_space<smem>>
      %447 = vector.extract_strided_slice %157 {offsets = [1, 0], sizes = [13, 128], strides = [1, 1]} : vector<14x128xf32> to vector<13x128xf32>
      %448 = vector.broadcast %446 : f32 to vector<13x128xf32>
      %449 = arith.mulf %448, %447 : vector<13x128xf32>
      %450 = arith.addf %445, %449 : vector<13x128xf32>
      %c6_182 = arith.constant 6 : index
      %c6_183 = arith.constant 6 : index
      %451 = memref.load %arg6[%c6_182, %c6_183] : memref<8x8xf32, #tpu.memory_space<smem>>
      %452 = vector.extract_strided_slice %169 {offsets = [0, 0], sizes = [13, 128], strides = [1, 1]} : vector<14x128xf32> to vector<13x128xf32>
      %453 = vector.broadcast %451 : f32 to vector<13x128xf32>
      %454 = arith.mulf %453, %452 : vector<13x128xf32>
      %455 = arith.addf %450, %454 : vector<13x128xf32>
      %c6_184 = arith.constant 6 : index
      %c7_185 = arith.constant 7 : index
      %456 = memref.load %arg6[%c6_184, %c7_185] : memref<8x8xf32, #tpu.memory_space<smem>>
      %457 = vector.extract_strided_slice %169 {offsets = [1, 0], sizes = [13, 128], strides = [1, 1]} : vector<14x128xf32> to vector<13x128xf32>
      %458 = vector.broadcast %456 : f32 to vector<13x128xf32>
      %459 = arith.mulf %458, %457 : vector<13x128xf32>
      %460 = arith.addf %455, %459 : vector<13x128xf32>
      %c0_186 = arith.constant 0 : index
      %c6_187 = arith.constant 6 : index
      %461 = memref.load %arg7[%c0_186, %c6_187] : memref<1x8xf32, #tpu.memory_space<smem>>
      %462 = vector.broadcast %461 : f32 to vector<13x128xf32>
      %463 = arith.addf %460, %462 : vector<13x128xf32>
      %c7_188 = arith.constant 7 : index
      %c0_189 = arith.constant 0 : index
      %464 = memref.load %arg6[%c7_188, %c0_189] : memref<8x8xf32, #tpu.memory_space<smem>>
      %465 = vector.extract_strided_slice %110 {offsets = [0, 0], sizes = [13, 128], strides = [1, 1]} : vector<14x128xf32> to vector<13x128xf32>
      %466 = vector.broadcast %464 : f32 to vector<13x128xf32>
      %467 = arith.mulf %466, %465 : vector<13x128xf32>
      %c7_190 = arith.constant 7 : index
      %c1_191 = arith.constant 1 : index
      %468 = memref.load %arg6[%c7_190, %c1_191] : memref<8x8xf32, #tpu.memory_space<smem>>
      %469 = vector.extract_strided_slice %110 {offsets = [1, 0], sizes = [13, 128], strides = [1, 1]} : vector<14x128xf32> to vector<13x128xf32>
      %470 = vector.broadcast %468 : f32 to vector<13x128xf32>
      %471 = arith.mulf %470, %469 : vector<13x128xf32>
      %472 = arith.addf %467, %471 : vector<13x128xf32>
      %c7_192 = arith.constant 7 : index
      %c2_193 = arith.constant 2 : index
      %473 = memref.load %arg6[%c7_192, %c2_193] : memref<8x8xf32, #tpu.memory_space<smem>>
      %474 = vector.extract_strided_slice %122 {offsets = [0, 0], sizes = [13, 128], strides = [1, 1]} : vector<14x128xf32> to vector<13x128xf32>
      %475 = vector.broadcast %473 : f32 to vector<13x128xf32>
      %476 = arith.mulf %475, %474 : vector<13x128xf32>
      %477 = arith.addf %472, %476 : vector<13x128xf32>
      %c7_194 = arith.constant 7 : index
      %c3_195 = arith.constant 3 : index
      %478 = memref.load %arg6[%c7_194, %c3_195] : memref<8x8xf32, #tpu.memory_space<smem>>
      %479 = vector.extract_strided_slice %122 {offsets = [1, 0], sizes = [13, 128], strides = [1, 1]} : vector<14x128xf32> to vector<13x128xf32>
      %480 = vector.broadcast %478 : f32 to vector<13x128xf32>
      %481 = arith.mulf %480, %479 : vector<13x128xf32>
      %482 = arith.addf %477, %481 : vector<13x128xf32>
      %c7_196 = arith.constant 7 : index
      %c4_197 = arith.constant 4 : index
      %483 = memref.load %arg6[%c7_196, %c4_197] : memref<8x8xf32, #tpu.memory_space<smem>>
      %484 = vector.extract_strided_slice %157 {offsets = [0, 0], sizes = [13, 128], strides = [1, 1]} : vector<14x128xf32> to vector<13x128xf32>
      %485 = vector.broadcast %483 : f32 to vector<13x128xf32>
      %486 = arith.mulf %485, %484 : vector<13x128xf32>
      %487 = arith.addf %482, %486 : vector<13x128xf32>
      %c7_198 = arith.constant 7 : index
      %c5_199 = arith.constant 5 : index
      %488 = memref.load %arg6[%c7_198, %c5_199] : memref<8x8xf32, #tpu.memory_space<smem>>
      %489 = vector.extract_strided_slice %157 {offsets = [1, 0], sizes = [13, 128], strides = [1, 1]} : vector<14x128xf32> to vector<13x128xf32>
      %490 = vector.broadcast %488 : f32 to vector<13x128xf32>
      %491 = arith.mulf %490, %489 : vector<13x128xf32>
      %492 = arith.addf %487, %491 : vector<13x128xf32>
      %c7_200 = arith.constant 7 : index
      %c6_201 = arith.constant 6 : index
      %493 = memref.load %arg6[%c7_200, %c6_201] : memref<8x8xf32, #tpu.memory_space<smem>>
      %494 = vector.extract_strided_slice %169 {offsets = [0, 0], sizes = [13, 128], strides = [1, 1]} : vector<14x128xf32> to vector<13x128xf32>
      %495 = vector.broadcast %493 : f32 to vector<13x128xf32>
      %496 = arith.mulf %495, %494 : vector<13x128xf32>
      %497 = arith.addf %492, %496 : vector<13x128xf32>
      %c7_202 = arith.constant 7 : index
      %c7_203 = arith.constant 7 : index
      %498 = memref.load %arg6[%c7_202, %c7_203] : memref<8x8xf32, #tpu.memory_space<smem>>
      %499 = vector.extract_strided_slice %169 {offsets = [1, 0], sizes = [13, 128], strides = [1, 1]} : vector<14x128xf32> to vector<13x128xf32>
      %500 = vector.broadcast %498 : f32 to vector<13x128xf32>
      %501 = arith.mulf %500, %499 : vector<13x128xf32>
      %502 = arith.addf %497, %501 : vector<13x128xf32>
      %c0_204 = arith.constant 0 : index
      %c7_205 = arith.constant 7 : index
      %503 = memref.load %arg7[%c0_204, %c7_205] : memref<1x8xf32, #tpu.memory_space<smem>>
      %504 = vector.broadcast %503 : f32 to vector<13x128xf32>
      %505 = arith.addf %502, %504 : vector<13x128xf32>
      %cst_206 = arith.constant dense<0.000000e+00> : vector<128xf32>
      %506 = vector.multi_reduction <add>, %211, %cst_206 [0] : vector<13x128xf32> to vector<128xf32>
      %507 = vector.shape_cast %506 : vector<128xf32> to vector<1x128xf32>
      %cst_207 = arith.constant dense<0.000000e+00> : vector<128xf32>
      %508 = vector.multi_reduction <add>, %253, %cst_207 [0] : vector<13x128xf32> to vector<128xf32>
      %509 = vector.shape_cast %508 : vector<128xf32> to vector<1x128xf32>
      %510 = arith.addf %507, %509 : vector<1x128xf32>
      %cst_208 = arith.constant 0.0384615399 : f32
      %511 = vector.broadcast %cst_208 : f32 to vector<1x128xf32>
      %512 = arith.mulf %510, %511 : vector<1x128xf32>
      %513 = vector.broadcast %512 : vector<1x128xf32> to vector<13x128xf32>
      %514 = arith.subf %211, %513 : vector<13x128xf32>
      %515 = arith.mulf %514, %514 : vector<13x128xf32>
      %cst_209 = arith.constant dense<0.000000e+00> : vector<128xf32>
      %516 = vector.multi_reduction <add>, %515, %cst_209 [0] : vector<13x128xf32> to vector<128xf32>
      %517 = vector.shape_cast %516 : vector<128xf32> to vector<1x128xf32>
      %518 = vector.broadcast %512 : vector<1x128xf32> to vector<13x128xf32>
      %519 = arith.subf %253, %518 : vector<13x128xf32>
      %520 = arith.mulf %519, %519 : vector<13x128xf32>
      %cst_210 = arith.constant dense<0.000000e+00> : vector<128xf32>
      %521 = vector.multi_reduction <add>, %520, %cst_210 [0] : vector<13x128xf32> to vector<128xf32>
      %522 = vector.shape_cast %521 : vector<128xf32> to vector<1x128xf32>
      %523 = arith.addf %517, %522 : vector<1x128xf32>
      %cst_211 = arith.constant 0.0384615399 : f32
      %524 = vector.broadcast %cst_211 : f32 to vector<1x128xf32>
      %525 = arith.mulf %523, %524 : vector<1x128xf32>
      %cst_212 = arith.constant 9.99999974E-6 : f32
      %526 = vector.broadcast %cst_212 : f32 to vector<1x128xf32>
      %527 = arith.addf %525, %526 : vector<1x128xf32>
      %528 = math.rsqrt %527 : vector<1x128xf32>
      %c0_213 = arith.constant 0 : index
      %c0_214 = arith.constant 0 : index
      %529 = memref.load %arg8[%c0_213, %c0_214] : memref<1x8xf32, #tpu.memory_space<smem>>
      %530 = vector.broadcast %529 : f32 to vector<1x128xf32>
      %531 = arith.mulf %530, %528 : vector<1x128xf32>
      %532 = vector.broadcast %512 : vector<1x128xf32> to vector<13x128xf32>
      %533 = arith.subf %211, %532 : vector<13x128xf32>
      %534 = vector.broadcast %531 : vector<1x128xf32> to vector<13x128xf32>
      %535 = arith.mulf %533, %534 : vector<13x128xf32>
      %c0_215 = arith.constant 0 : index
      %c0_216 = arith.constant 0 : index
      %536 = memref.load %arg9[%c0_215, %c0_216] : memref<1x8xf32, #tpu.memory_space<smem>>
      %537 = vector.broadcast %536 : f32 to vector<13x128xf32>
      %538 = arith.addf %535, %537 : vector<13x128xf32>
      %cst_217 = arith.constant 0.000000e+00 : f32
      %539 = vector.broadcast %cst_217 : f32 to vector<13x128xf32>
      %540 = arith.maximumf %538, %539 : vector<13x128xf32>
      %c0_218 = arith.constant 0 : index
      %c0_219 = arith.constant 0 : index
      %541 = arith.index_cast %4 : i32 to index
      %542 = vector.load %arg10[%c0_218, %c0_219, %541] : memref<8x13x256xf32, #tpu.memory_space<vmem>>, vector<1x13x128xf32>
      %543 = vector.shape_cast %542 : vector<1x13x128xf32> to vector<13x128xf32>
      %544 = vector.shape_cast %540 : vector<13x128xf32> to vector<1x13x128xf32>
      tpu.vector_store %arg10[%c0_218, %c0_219, %541], %544 {strides = array<i32>} : memref<8x13x256xf32, #tpu.memory_space<vmem>>, vector<1x13x128xf32>,
      %c0_220 = arith.constant 0 : index
      %c1_221 = arith.constant 1 : index
      %545 = memref.load %arg8[%c0_220, %c1_221] : memref<1x8xf32, #tpu.memory_space<smem>>
      %546 = vector.broadcast %545 : f32 to vector<1x128xf32>
      %547 = arith.mulf %546, %528 : vector<1x128xf32>
      %548 = vector.broadcast %512 : vector<1x128xf32> to vector<13x128xf32>
      %549 = arith.subf %253, %548 : vector<13x128xf32>
      %550 = vector.broadcast %547 : vector<1x128xf32> to vector<13x128xf32>
      %551 = arith.mulf %549, %550 : vector<13x128xf32>
      %c0_222 = arith.constant 0 : index
      %c1_223 = arith.constant 1 : index
      %552 = memref.load %arg9[%c0_222, %c1_223] : memref<1x8xf32, #tpu.memory_space<smem>>
      %553 = vector.broadcast %552 : f32 to vector<13x128xf32>
      %554 = arith.addf %551, %553 : vector<13x128xf32>
      %cst_224 = arith.constant 0.000000e+00 : f32
      %555 = vector.broadcast %cst_224 : f32 to vector<13x128xf32>
      %556 = arith.maximumf %554, %555 : vector<13x128xf32>
      %c1_225 = arith.constant 1 : index
      %c0_226 = arith.constant 0 : index
      %557 = arith.index_cast %4 : i32 to index
      %558 = vector.load %arg10[%c1_225, %c0_226, %557] : memref<8x13x256xf32, #tpu.memory_space<vmem>>, vector<1x13x128xf32>
      %559 = vector.shape_cast %558 : vector<1x13x128xf32> to vector<13x128xf32>
      %560 = vector.shape_cast %556 : vector<13x128xf32> to vector<1x13x128xf32>
      tpu.vector_store %arg10[%c1_225, %c0_226, %557], %560 {strides = array<i32>} : memref<8x13x256xf32, #tpu.memory_space<vmem>>, vector<1x13x128xf32>,
      %cst_227 = arith.constant dense<0.000000e+00> : vector<128xf32>
      %561 = vector.multi_reduction <add>, %295, %cst_227 [0] : vector<13x128xf32> to vector<128xf32>
      %562 = vector.shape_cast %561 : vector<128xf32> to vector<1x128xf32>
      %cst_228 = arith.constant dense<0.000000e+00> : vector<128xf32>
      %563 = vector.multi_reduction <add>, %337, %cst_228 [0] : vector<13x128xf32> to vector<128xf32>
      %564 = vector.shape_cast %563 : vector<128xf32> to vector<1x128xf32>
      %565 = arith.addf %562, %564 : vector<1x128xf32>
      %cst_229 = arith.constant 0.0384615399 : f32
      %566 = vector.broadcast %cst_229 : f32 to vector<1x128xf32>
      %567 = arith.mulf %565, %566 : vector<1x128xf32>
      %568 = vector.broadcast %567 : vector<1x128xf32> to vector<13x128xf32>
      %569 = arith.subf %295, %568 : vector<13x128xf32>
      %570 = arith.mulf %569, %569 : vector<13x128xf32>
      %cst_230 = arith.constant dense<0.000000e+00> : vector<128xf32>
      %571 = vector.multi_reduction <add>, %570, %cst_230 [0] : vector<13x128xf32> to vector<128xf32>
      %572 = vector.shape_cast %571 : vector<128xf32> to vector<1x128xf32>
      %573 = vector.broadcast %567 : vector<1x128xf32> to vector<13x128xf32>
      %574 = arith.subf %337, %573 : vector<13x128xf32>
      %575 = arith.mulf %574, %574 : vector<13x128xf32>
      %cst_231 = arith.constant dense<0.000000e+00> : vector<128xf32>
      %576 = vector.multi_reduction <add>, %575, %cst_231 [0] : vector<13x128xf32> to vector<128xf32>
      %577 = vector.shape_cast %576 : vector<128xf32> to vector<1x128xf32>
      %578 = arith.addf %572, %577 : vector<1x128xf32>
      %cst_232 = arith.constant 0.0384615399 : f32
      %579 = vector.broadcast %cst_232 : f32 to vector<1x128xf32>
      %580 = arith.mulf %578, %579 : vector<1x128xf32>
      %cst_233 = arith.constant 9.99999974E-6 : f32
      %581 = vector.broadcast %cst_233 : f32 to vector<1x128xf32>
      %582 = arith.addf %580, %581 : vector<1x128xf32>
      %583 = math.rsqrt %582 : vector<1x128xf32>
      %c0_234 = arith.constant 0 : index
      %c2_235 = arith.constant 2 : index
      %584 = memref.load %arg8[%c0_234, %c2_235] : memref<1x8xf32, #tpu.memory_space<smem>>
      %585 = vector.broadcast %584 : f32 to vector<1x128xf32>
      %586 = arith.mulf %585, %583 : vector<1x128xf32>
      %587 = vector.broadcast %567 : vector<1x128xf32> to vector<13x128xf32>
      %588 = arith.subf %295, %587 : vector<13x128xf32>
      %589 = vector.broadcast %586 : vector<1x128xf32> to vector<13x128xf32>
      %590 = arith.mulf %588, %589 : vector<13x128xf32>
      %c0_236 = arith.constant 0 : index
      %c2_237 = arith.constant 2 : index
      %591 = memref.load %arg9[%c0_236, %c2_237] : memref<1x8xf32, #tpu.memory_space<smem>>
      %592 = vector.broadcast %591 : f32 to vector<13x128xf32>
      %593 = arith.addf %590, %592 : vector<13x128xf32>
      %cst_238 = arith.constant 0.000000e+00 : f32
      %594 = vector.broadcast %cst_238 : f32 to vector<13x128xf32>
      %595 = arith.maximumf %593, %594 : vector<13x128xf32>
      %c2_239 = arith.constant 2 : index
      %c0_240 = arith.constant 0 : index
      %596 = arith.index_cast %4 : i32 to index
      %597 = vector.load %arg10[%c2_239, %c0_240, %596] : memref<8x13x256xf32, #tpu.memory_space<vmem>>, vector<1x13x128xf32>
      %598 = vector.shape_cast %597 : vector<1x13x128xf32> to vector<13x128xf32>
      %599 = vector.shape_cast %595 : vector<13x128xf32> to vector<1x13x128xf32>
      tpu.vector_store %arg10[%c2_239, %c0_240, %596], %599 {strides = array<i32>} : memref<8x13x256xf32, #tpu.memory_space<vmem>>, vector<1x13x128xf32>,
      %c0_241 = arith.constant 0 : index
      %c3_242 = arith.constant 3 : index
      %600 = memref.load %arg8[%c0_241, %c3_242] : memref<1x8xf32, #tpu.memory_space<smem>>
      %601 = vector.broadcast %600 : f32 to vector<1x128xf32>
      %602 = arith.mulf %601, %583 : vector<1x128xf32>
      %603 = vector.broadcast %567 : vector<1x128xf32> to vector<13x128xf32>
      %604 = arith.subf %337, %603 : vector<13x128xf32>
      %605 = vector.broadcast %602 : vector<1x128xf32> to vector<13x128xf32>
      %606 = arith.mulf %604, %605 : vector<13x128xf32>
      %c0_243 = arith.constant 0 : index
      %c3_244 = arith.constant 3 : index
      %607 = memref.load %arg9[%c0_243, %c3_244] : memref<1x8xf32, #tpu.memory_space<smem>>
      %608 = vector.broadcast %607 : f32 to vector<13x128xf32>
      %609 = arith.addf %606, %608 : vector<13x128xf32>
      %cst_245 = arith.constant 0.000000e+00 : f32
      %610 = vector.broadcast %cst_245 : f32 to vector<13x128xf32>
      %611 = arith.maximumf %609, %610 : vector<13x128xf32>
      %c3_246 = arith.constant 3 : index
      %c0_247 = arith.constant 0 : index
      %612 = arith.index_cast %4 : i32 to index
      %613 = vector.load %arg10[%c3_246, %c0_247, %612] : memref<8x13x256xf32, #tpu.memory_space<vmem>>, vector<1x13x128xf32>
      %614 = vector.shape_cast %613 : vector<1x13x128xf32> to vector<13x128xf32>
      %615 = vector.shape_cast %611 : vector<13x128xf32> to vector<1x13x128xf32>
      tpu.vector_store %arg10[%c3_246, %c0_247, %612], %615 {strides = array<i32>} : memref<8x13x256xf32, #tpu.memory_space<vmem>>, vector<1x13x128xf32>,
      %cst_248 = arith.constant dense<0.000000e+00> : vector<128xf32>
      %616 = vector.multi_reduction <add>, %379, %cst_248 [0] : vector<13x128xf32> to vector<128xf32>
      %617 = vector.shape_cast %616 : vector<128xf32> to vector<1x128xf32>
      %cst_249 = arith.constant dense<0.000000e+00> : vector<128xf32>
      %618 = vector.multi_reduction <add>, %421, %cst_249 [0] : vector<13x128xf32> to vector<128xf32>
      %619 = vector.shape_cast %618 : vector<128xf32> to vector<1x128xf32>
      %620 = arith.addf %617, %619 : vector<1x128xf32>
      %cst_250 = arith.constant 0.0384615399 : f32
      %621 = vector.broadcast %cst_250 : f32 to vector<1x128xf32>
      %622 = arith.mulf %620, %621 : vector<1x128xf32>
      %623 = vector.broadcast %622 : vector<1x128xf32> to vector<13x128xf32>
      %624 = arith.subf %379, %623 : vector<13x128xf32>
      %625 = arith.mulf %624, %624 : vector<13x128xf32>
      %cst_251 = arith.constant dense<0.000000e+00> : vector<128xf32>
      %626 = vector.multi_reduction <add>, %625, %cst_251 [0] : vector<13x128xf32> to vector<128xf32>
      %627 = vector.shape_cast %626 : vector<128xf32> to vector<1x128xf32>
      %628 = vector.broadcast %622 : vector<1x128xf32> to vector<13x128xf32>
      %629 = arith.subf %421, %628 : vector<13x128xf32>
      %630 = arith.mulf %629, %629 : vector<13x128xf32>
      %cst_252 = arith.constant dense<0.000000e+00> : vector<128xf32>
      %631 = vector.multi_reduction <add>, %630, %cst_252 [0] : vector<13x128xf32> to vector<128xf32>
      %632 = vector.shape_cast %631 : vector<128xf32> to vector<1x128xf32>
      %633 = arith.addf %627, %632 : vector<1x128xf32>
      %cst_253 = arith.constant 0.0384615399 : f32
      %634 = vector.broadcast %cst_253 : f32 to vector<1x128xf32>
      %635 = arith.mulf %633, %634 : vector<1x128xf32>
      %cst_254 = arith.constant 9.99999974E-6 : f32
      %636 = vector.broadcast %cst_254 : f32 to vector<1x128xf32>
      %637 = arith.addf %635, %636 : vector<1x128xf32>
      %638 = math.rsqrt %637 : vector<1x128xf32>
      %c0_255 = arith.constant 0 : index
      %c4_256 = arith.constant 4 : index
      %639 = memref.load %arg8[%c0_255, %c4_256] : memref<1x8xf32, #tpu.memory_space<smem>>
      %640 = vector.broadcast %639 : f32 to vector<1x128xf32>
      %641 = arith.mulf %640, %638 : vector<1x128xf32>
      %642 = vector.broadcast %622 : vector<1x128xf32> to vector<13x128xf32>
      %643 = arith.subf %379, %642 : vector<13x128xf32>
      %644 = vector.broadcast %641 : vector<1x128xf32> to vector<13x128xf32>
      %645 = arith.mulf %643, %644 : vector<13x128xf32>
      %c0_257 = arith.constant 0 : index
      %c4_258 = arith.constant 4 : index
      %646 = memref.load %arg9[%c0_257, %c4_258] : memref<1x8xf32, #tpu.memory_space<smem>>
      %647 = vector.broadcast %646 : f32 to vector<13x128xf32>
      %648 = arith.addf %645, %647 : vector<13x128xf32>
      %cst_259 = arith.constant 0.000000e+00 : f32
      %649 = vector.broadcast %cst_259 : f32 to vector<13x128xf32>
      %650 = arith.maximumf %648, %649 : vector<13x128xf32>
      %c4_260 = arith.constant 4 : index
      %c0_261 = arith.constant 0 : index
      %651 = arith.index_cast %4 : i32 to index
      %652 = vector.load %arg10[%c4_260, %c0_261, %651] : memref<8x13x256xf32, #tpu.memory_space<vmem>>, vector<1x13x128xf32>
      %653 = vector.shape_cast %652 : vector<1x13x128xf32> to vector<13x128xf32>
      %654 = vector.shape_cast %650 : vector<13x128xf32> to vector<1x13x128xf32>
      tpu.vector_store %arg10[%c4_260, %c0_261, %651], %654 {strides = array<i32>} : memref<8x13x256xf32, #tpu.memory_space<vmem>>, vector<1x13x128xf32>,
      %c0_262 = arith.constant 0 : index
      %c5_263 = arith.constant 5 : index
      %655 = memref.load %arg8[%c0_262, %c5_263] : memref<1x8xf32, #tpu.memory_space<smem>>
      %656 = vector.broadcast %655 : f32 to vector<1x128xf32>
      %657 = arith.mulf %656, %638 : vector<1x128xf32>
      %658 = vector.broadcast %622 : vector<1x128xf32> to vector<13x128xf32>
      %659 = arith.subf %421, %658 : vector<13x128xf32>
      %660 = vector.broadcast %657 : vector<1x128xf32> to vector<13x128xf32>
      %661 = arith.mulf %659, %660 : vector<13x128xf32>
      %c0_264 = arith.constant 0 : index
      %c5_265 = arith.constant 5 : index
      %662 = memref.load %arg9[%c0_264, %c5_265] : memref<1x8xf32, #tpu.memory_space<smem>>
      %663 = vector.broadcast %662 : f32 to vector<13x128xf32>
      %664 = arith.addf %661, %663 : vector<13x128xf32>
      %cst_266 = arith.constant 0.000000e+00 : f32
      %665 = vector.broadcast %cst_266 : f32 to vector<13x128xf32>
      %666 = arith.maximumf %664, %665 : vector<13x128xf32>
      %c5_267 = arith.constant 5 : index
      %c0_268 = arith.constant 0 : index
      %667 = arith.index_cast %4 : i32 to index
      %668 = vector.load %arg10[%c5_267, %c0_268, %667] : memref<8x13x256xf32, #tpu.memory_space<vmem>>, vector<1x13x128xf32>
      %669 = vector.shape_cast %668 : vector<1x13x128xf32> to vector<13x128xf32>
      %670 = vector.shape_cast %666 : vector<13x128xf32> to vector<1x13x128xf32>
      tpu.vector_store %arg10[%c5_267, %c0_268, %667], %670 {strides = array<i32>} : memref<8x13x256xf32, #tpu.memory_space<vmem>>, vector<1x13x128xf32>,
      %cst_269 = arith.constant dense<0.000000e+00> : vector<128xf32>
      %671 = vector.multi_reduction <add>, %463, %cst_269 [0] : vector<13x128xf32> to vector<128xf32>
      %672 = vector.shape_cast %671 : vector<128xf32> to vector<1x128xf32>
      %cst_270 = arith.constant dense<0.000000e+00> : vector<128xf32>
      %673 = vector.multi_reduction <add>, %505, %cst_270 [0] : vector<13x128xf32> to vector<128xf32>
      %674 = vector.shape_cast %673 : vector<128xf32> to vector<1x128xf32>
      %675 = arith.addf %672, %674 : vector<1x128xf32>
      %cst_271 = arith.constant 0.0384615399 : f32
      %676 = vector.broadcast %cst_271 : f32 to vector<1x128xf32>
      %677 = arith.mulf %675, %676 : vector<1x128xf32>
      %678 = vector.broadcast %677 : vector<1x128xf32> to vector<13x128xf32>
      %679 = arith.subf %463, %678 : vector<13x128xf32>
      %680 = arith.mulf %679, %679 : vector<13x128xf32>
      %cst_272 = arith.constant dense<0.000000e+00> : vector<128xf32>
      %681 = vector.multi_reduction <add>, %680, %cst_272 [0] : vector<13x128xf32> to vector<128xf32>
      %682 = vector.shape_cast %681 : vector<128xf32> to vector<1x128xf32>
      %683 = vector.broadcast %677 : vector<1x128xf32> to vector<13x128xf32>
      %684 = arith.subf %505, %683 : vector<13x128xf32>
      %685 = arith.mulf %684, %684 : vector<13x128xf32>
      %cst_273 = arith.constant dense<0.000000e+00> : vector<128xf32>
      %686 = vector.multi_reduction <add>, %685, %cst_273 [0] : vector<13x128xf32> to vector<128xf32>
      %687 = vector.shape_cast %686 : vector<128xf32> to vector<1x128xf32>
      %688 = arith.addf %682, %687 : vector<1x128xf32>
      %cst_274 = arith.constant 0.0384615399 : f32
      %689 = vector.broadcast %cst_274 : f32 to vector<1x128xf32>
      %690 = arith.mulf %688, %689 : vector<1x128xf32>
      %cst_275 = arith.constant 9.99999974E-6 : f32
      %691 = vector.broadcast %cst_275 : f32 to vector<1x128xf32>
      %692 = arith.addf %690, %691 : vector<1x128xf32>
      %693 = math.rsqrt %692 : vector<1x128xf32>
      %c0_276 = arith.constant 0 : index
      %c6_277 = arith.constant 6 : index
      %694 = memref.load %arg8[%c0_276, %c6_277] : memref<1x8xf32, #tpu.memory_space<smem>>
      %695 = vector.broadcast %694 : f32 to vector<1x128xf32>
      %696 = arith.mulf %695, %693 : vector<1x128xf32>
      %697 = vector.broadcast %677 : vector<1x128xf32> to vector<13x128xf32>
      %698 = arith.subf %463, %697 : vector<13x128xf32>
      %699 = vector.broadcast %696 : vector<1x128xf32> to vector<13x128xf32>
      %700 = arith.mulf %698, %699 : vector<13x128xf32>
      %c0_278 = arith.constant 0 : index
      %c6_279 = arith.constant 6 : index
      %701 = memref.load %arg9[%c0_278, %c6_279] : memref<1x8xf32, #tpu.memory_space<smem>>
      %702 = vector.broadcast %701 : f32 to vector<13x128xf32>
      %703 = arith.addf %700, %702 : vector<13x128xf32>
      %cst_280 = arith.constant 0.000000e+00 : f32
      %704 = vector.broadcast %cst_280 : f32 to vector<13x128xf32>
      %705 = arith.maximumf %703, %704 : vector<13x128xf32>
      %c6_281 = arith.constant 6 : index
      %c0_282 = arith.constant 0 : index
      %706 = arith.index_cast %4 : i32 to index
      %707 = vector.load %arg10[%c6_281, %c0_282, %706] : memref<8x13x256xf32, #tpu.memory_space<vmem>>, vector<1x13x128xf32>
      %708 = vector.shape_cast %707 : vector<1x13x128xf32> to vector<13x128xf32>
      %709 = vector.shape_cast %705 : vector<13x128xf32> to vector<1x13x128xf32>
      tpu.vector_store %arg10[%c6_281, %c0_282, %706], %709 {strides = array<i32>} : memref<8x13x256xf32, #tpu.memory_space<vmem>>, vector<1x13x128xf32>,
      %c0_283 = arith.constant 0 : index
      %c7_284 = arith.constant 7 : index
      %710 = memref.load %arg8[%c0_283, %c7_284] : memref<1x8xf32, #tpu.memory_space<smem>>
      %711 = vector.broadcast %710 : f32 to vector<1x128xf32>
      %712 = arith.mulf %711, %693 : vector<1x128xf32>
      %713 = vector.broadcast %677 : vector<1x128xf32> to vector<13x128xf32>
      %714 = arith.subf %505, %713 : vector<13x128xf32>
      %715 = vector.broadcast %712 : vector<1x128xf32> to vector<13x128xf32>
      %716 = arith.mulf %714, %715 : vector<13x128xf32>
      %c0_285 = arith.constant 0 : index
      %c7_286 = arith.constant 7 : index
      %717 = memref.load %arg9[%c0_285, %c7_286] : memref<1x8xf32, #tpu.memory_space<smem>>
      %718 = vector.broadcast %717 : f32 to vector<13x128xf32>
      %719 = arith.addf %716, %718 : vector<13x128xf32>
      %cst_287 = arith.constant 0.000000e+00 : f32
      %720 = vector.broadcast %cst_287 : f32 to vector<13x128xf32>
      %721 = arith.maximumf %719, %720 : vector<13x128xf32>
      %c7_288 = arith.constant 7 : index
      %c0_289 = arith.constant 0 : index
      %722 = arith.index_cast %4 : i32 to index
      %723 = vector.load %arg10[%c7_288, %c0_289, %722] : memref<8x13x256xf32, #tpu.memory_space<vmem>>, vector<1x13x128xf32>
      %724 = vector.shape_cast %723 : vector<1x13x128xf32> to vector<13x128xf32>
      %725 = vector.shape_cast %721 : vector<13x128xf32> to vector<1x13x128xf32>
      tpu.vector_store %arg10[%c7_288, %c0_289, %722], %725 {strides = array<i32>} : memref<8x13x256xf32, #tpu.memory_space<vmem>>, vector<1x13x128xf32>,
    }
    %c2_i32_0 = arith.constant 2 : i32
    return
  }
  func.func @transform_0(%arg0: i32) -> (i32, i32, i32) {
    %c0_i32 = arith.constant 0 : i32
    %c0_i32_0 = arith.constant 0 : i32
    %c0_i32_1 = arith.constant 0 : i32
    return %c0_i32, %c0_i32_0, %arg0 : i32, i32, i32
  }
  func.func @transform_1(%arg0: i32) -> (i32, i32) {
    %c0_i32 = arith.constant 0 : i32
    %c0_i32_0 = arith.constant 0 : i32
    %c0_i32_1 = arith.constant 0 : i32
    return %c0_i32, %c0_i32_0 : i32, i32
  }
  func.func @transform_2(%arg0: i32) -> (i32, i32) {
    %c0_i32 = arith.constant 0 : i32
    %c0_i32_0 = arith.constant 0 : i32
    %c0_i32_1 = arith.constant 0 : i32
    return %c0_i32, %c0_i32_0 : i32, i32
  }
  func.func @transform_3(%arg0: i32) -> (i32, i32) {
    %c0_i32 = arith.constant 0 : i32
    %c0_i32_0 = arith.constant 0 : i32
    %c0_i32_1 = arith.constant 0 : i32
    return %c0_i32, %c0_i32_0 : i32, i32
  }
  func.func @transform_4(%arg0: i32) -> (i32, i32) {
    %c0_i32 = arith.constant 0 : i32
    %c0_i32_0 = arith.constant 0 : i32
    %c0_i32_1 = arith.constant 0 : i32
    return %c0_i32, %c0_i32_0 : i32, i32
  }
  func.func @transform_5(%arg0: i32) -> (i32, i32) {
    %c0_i32 = arith.constant 0 : i32
    %c0_i32_0 = arith.constant 0 : i32
    %c0_i32_1 = arith.constant 0 : i32
    return %c0_i32, %c0_i32_0 : i32, i32
  }
  func.func @transform_6(%arg0: i32) -> (i32, i32) {
    %c0_i32 = arith.constant 0 : i32
    %c0_i32_0 = arith.constant 0 : i32
    %c0_i32_1 = arith.constant 0 : i32
    return %c0_i32, %c0_i32_0 : i32, i32
  }
  func.func @transform_7(%arg0: i32) -> (i32, i32) {
    %c0_i32 = arith.constant 0 : i32
    %c0_i32_0 = arith.constant 0 : i32
    %c0_i32_1 = arith.constant 0 : i32
    return %c0_i32, %c0_i32_0 : i32, i32
  }
  func.func @transform_8(%arg0: i32) -> (i32, i32) {
    %c0_i32 = arith.constant 0 : i32
    %c0_i32_0 = arith.constant 0 : i32
    %c0_i32_1 = arith.constant 0 : i32
    return %c0_i32, %c0_i32_0 : i32, i32
  }
  func.func @transform_9(%arg0: i32) -> (i32, i32, i32) {
    %c0_i32 = arith.constant 0 : i32
    %c0_i32_0 = arith.constant 0 : i32
    %c0_i32_1 = arith.constant 0 : i32
    return %c0_i32, %c0_i32_0, %arg0 : i32, i32, i32
  }
}

</mosaic_0001>

<llo_original>
// kernel: tpu_custom_call.1
$region0: #{tpu_custom_call.1}
  #allocation0 [shape = 'u32[]', space=smem, size = 0x4, offset = 0x4, fixed_abs, tag = 'smem constant byte address 0x4 - core index']
  #allocation1 [shape = 'u32[144,128]{1,0:T(1,128)}', space=vmem, size = 0x12000, scoped, tag = 'internal scratch']
  %s0 = inlined_call_operand.hbm [shape: f32[1,16,512], index: 0, kind: input, shape index: {}]
  %s1 = inlined_call_operand.hbm [shape: f32[4,3], index: 1, kind: input, shape index: {}]
  %s2 = inlined_call_operand.vmem [shape: f32[1,4], index: 2, kind: input, shape index: {}]
  %s3 = inlined_call_operand.hbm [shape: f32[1,4], index: 3, kind: input, shape index: {}]
  %s4 = inlined_call_operand.hbm [shape: f32[1,4], index: 4, kind: input, shape index: {}]
  %s5 = inlined_call_operand.vmem [shape: f32[8,8], index: 5, kind: input, shape index: {}]
  %s6 = inlined_call_operand.vmem [shape: f32[1,8], index: 6, kind: input, shape index: {}]
  %s7 = inlined_call_operand.vmem [shape: f32[1,8], index: 7, kind: input, shape index: {}]
  %s8 = inlined_call_operand.vmem [shape: f32[1,8], index: 8, kind: input, shape index: {}]
  %s9 = inlined_call_operand.vmem [shape: f32[8,13,512], index: 9, kind: output, shape index: {}]
  %s10 = sld [smem:[#allocation0]]
  $region131: #{tpu_custom_call.1} parent=0
    _
  %s12 = ssub.s32 1, %s10
  %s13 = scalar_select 0, %s12, %s10
  $region1: #{tpu_custom_call.1} parent=0
    #allocation2 [shape = 'u8[32768]{0}', space=vmem, size = 0x8000, scoped, tag = 'input window, operand 0']
    #allocation3 [shape = 's32[2]{0}', space=sflag, size = 0x8, scoped, tag = 'scoped memory for tpu_custom_call.1']
    #allocation4 [shape = 's32[2]{0}', space=sflag, size = 0x8, scoped, tag = 'scoped memory for tpu_custom_call.1']
    #allocation5 [shape = 's32[2]{0}', space=sflag, size = 0x8, scoped, tag = 'scoped memory for tpu_custom_call.1']
    #allocation6 [shape = 'u8[2048]{0}', space=smem, size = 0x800, scoped, tag = 'input window, operand 1, single buffered']
    #allocation7 [shape = 'u8[512]{0}', space=smem, size = 0x200, scoped, tag = 'input window, operand 2, single buffered']
    #allocation8 [shape = 'u8[512]{0}', space=smem, size = 0x200, scoped, tag = 'input window, operand 3, single buffered']
    #allocation9 [shape = 's32[1]{0}', space=sflag, size = 0x4, scoped, tag = 'scoped memory for tpu_custom_call.1']
    #allocation10 [shape = 'u8[512]{0}', space=smem, size = 0x200, scoped, tag = 'input window, operand 4, single buffered']
    #allocation11 [shape = 'u8[4096]{0}', space=smem, size = 0x1000, scoped, tag = 'input window, operand 5, single buffered']
    #allocation12 [shape = 's32[1]{0}', space=sflag, size = 0x4, scoped, tag = 'scoped memory for tpu_custom_call.1']
    #allocation13 [shape = 'u8[512]{0}', space=smem, size = 0x200, scoped, tag = 'input window, operand 6, single buffered']
    #allocation14 [shape = 'u8[512]{0}', space=smem, size = 0x200, scoped, tag = 'input window, operand 7, single buffered']
    #allocation15 [shape = 's32[1]{0}', space=sflag, size = 0x4, scoped, tag = 'scoped memory for tpu_custom_call.1']
    #allocation16 [shape = 'u8[512]{0}', space=smem, size = 0x200, scoped, tag = 'input window, operand 8, single buffered']
    #allocation17 [shape = 'u8[262144]{0}', space=vmem, size = 0x40000, scoped, tag = 'output window, operand 0']
    %14 = vsyncpa [#allocation3], 0
    %s15 = scalar_lea.sflag [#allocation3], 1
    %16 = vsyncpa %s15, 0
    %17 = vsyncpa [#allocation4], 0
    %18 = vsyncpa [#allocation5], 0
    %19 = vsyncpa [#allocation9], 0
    %20 = vsyncpa [#allocation12], 0
    %21 = vsyncpa [#allocation15], 0
    loop: start=0, step=1, limit=4
    $region2: #{tpu_custom_call.1} parent=1 // loop_pre_header
      _
    $region3: #{tpu_custom_call.1} parent=1 // loop_header
      %s23 = sphi 0, %s27
      %p24 = scmp.ge.s32.totalorder %s23, 4
      %s33 = sphi 0, %s35
      %s36 = sphi 0, %s33
      %s37 = sphi 0, %s36
      %s53 = sphi 0, %s37
      %s57 = sphi 0, %s57
      %s59 = sphi 0, %s57
      %s60 = sphi 0, %s59
      %s74 = sphi 0, %s60
      %s78 = sphi 0, %s78
      %s80 = sphi 0, %s78
      %s81 = sphi 0, %s80
      %s95 = sphi 0, %s81
      %s99 = sphi 0, %s99
      %s101 = sphi 0, %s99
      %s102 = sphi 0, %s101
      %s116 = sphi 0, %s102
      %s120 = sphi 0, %s120
      %s122 = sphi 0, %s120
      %s123 = sphi 0, %s122
      %s137 = sphi 0, %s123
      %s141 = sphi 0, %s141
      %s143 = sphi 0, %s141
      %s144 = sphi 0, %s143
      %s158 = sphi 0, %s144
      %s162 = sphi 0, %s162
      %s164 = sphi 0, %s162
      %s165 = sphi 0, %s164
      %s179 = sphi 0, %s165
      %s183 = sphi 0, %s183
      %s185 = sphi 0, %s183
      %s186 = sphi 0, %s185
      %s200 = sphi 0, %s186
      %s204 = sphi 0, %s204
      %s206 = sphi 0, %s204
      %s207 = sphi 0, %s206
      %s221 = sphi 0, %s207
      %s227 = sphi 0, %s229
      %s230 = sphi 0, %s227
      %s231 = sphi 0, %s230
      %s247 = sphi 0, %s231
    $region4: #{tpu_custom_call.1} parent=1 // loop_header_branch
      %26 = sbr.rel (%p24) target = $region8
    $region5: #{tpu_custom_call.1} parent=1 // loop_body
      %s28 = ssub.s32 %s23, 1
      %s29 = ssub.s32 %s23, 2
      %s30 = sadd.s32 %s23, 1
      %s31 = ssub.s32 %s23, %s30
      %p32 = scmp.eq.s32.totalorder %s31, 0
      %s34 = sadd.s32 %s33, 1
      %s35 = scalar_select %p32, %s33, %s34
      %p38 = pneg %p32
      %p39 = scmp.eq.s32.totalorder %s23, 1
      %p40 = por %p38, %p39
      %p41 = scmp.ne.s32.totalorder %s33, %s36
      %p42 = scmp.eq.s32.totalorder %s23, 0
      %p43 = por %p41, %p42
      %p44 = scmp.ne.s32.totalorder %s33, %s36
      %p45 = scmp.eq.s32.totalorder %s28, 1
      %p46 = por %p44, %p45
      %p47 = scmp.ne.s32.totalorder %s36, %s37
      %p48 = scmp.eq.s32.totalorder %s28, 0
      %p49 = por %p47, %p48
      %p50 = scmp.ne.s32.totalorder %s36, %s37
      %p51 = scmp.eq.s32.totalorder %s29, 1
      %p52 = por %p50, %p51
      %p54 = scmp.ne.s32.totalorder %s37, %s53
      %p55 = scmp.eq.s32.totalorder %s29, 0
      %p56 = por %p54, %p55
      %s58 = sadd.s32 %s57, 1
      %p61 = scmp.eq.s32.totalorder %s23, 1
      %p62 = scmp.ne.s32.totalorder %s57, %s59
      %p63 = scmp.eq.s32.totalorder %s23, 0
      %p64 = por %p62, %p63
      %p65 = scmp.ne.s32.totalorder %s57, %s59
      %p66 = scmp.eq.s32.totalorder %s28, 1
      %p67 = por %p65, %p66
      %p68 = scmp.ne.s32.totalorder %s59, %s60
      %p69 = scmp.eq.s32.totalorder %s28, 0
      %p70 = por %p68, %p69
      %p71 = scmp.ne.s32.totalorder %s59, %s60
      %p72 = scmp.eq.s32.totalorder %s29, 1
      %p73 = por %p71, %p72
      %p75 = scmp.ne.s32.totalorder %s60, %s74
      %p76 = scmp.eq.s32.totalorder %s29, 0
      %p77 = por %p75, %p76
      %s79 = sadd.s32 %s78, 1
      %p82 = scmp.eq.s32.totalorder %s23, 1
      %p83 = scmp.ne.s32.totalorder %s78, %s80
      %p84 = scmp.eq.s32.totalorder %s23, 0
      %p85 = por %p83, %p84
      %p86 = scmp.ne.s32.totalorder %s78, %s80
      %p87 = scmp.eq.s32.totalorder %s28, 1
      %p88 = por %p86, %p87
      %p89 = scmp.ne.s32.totalorder %s80, %s81
      %p90 = scmp.eq.s32.totalorder %s28, 0
      %p91 = por %p89, %p90
      %p92 = scmp.ne.s32.totalorder %s80, %s81
      %p93 = scmp.eq.s32.totalorder %s29, 1
      %p94 = por %p92, %p93
      %p96 = scmp.ne.s32.totalorder %s81, %s95
      %p97 = scmp.eq.s32.totalorder %s29, 0
      %p98 = por %p96, %p97
      %s100 = sadd.s32 %s99, 1
      %p103 = scmp.eq.s32.totalorder %s23, 1
      %p104 = scmp.ne.s32.totalorder %s99, %s101
      %p105 = scmp.eq.s32.totalorder %s23, 0
      %p106 = por %p104, %p105
      %p107 = scmp.ne.s32.totalorder %s99, %s101
      %p108 = scmp.eq.s32.totalorder %s28, 1
      %p109 = por %p107, %p108
      %p110 = scmp.ne.s32.totalorder %s101, %s102
      %p111 = scmp.eq.s32.totalorder %s28, 0
      %p112 = por %p110, %p111
      %p113 = scmp.ne.s32.totalorder %s101, %s102
      %p114 = scmp.eq.s32.totalorder %s29, 1
      %p115 = por %p113, %p114
      %p117 = scmp.ne.s32.totalorder %s102, %s116
      %p118 = scmp.eq.s32.totalorder %s29, 0
      %p119 = por %p117, %p118
      %s121 = sadd.s32 %s120, 1
      %p124 = scmp.eq.s32.totalorder %s23, 1
      %p125 = scmp.ne.s32.totalorder %s120, %s122
      %p126 = scmp.eq.s32.totalorder %s23, 0
      %p127 = por %p125, %p126
      %p128 = scmp.ne.s32.totalorder %s120, %s122
      %p129 = scmp.eq.s32.totalorder %s28, 1
      %p130 = por %p128, %p129
      %p131 = scmp.ne.s32.totalorder %s122, %s123
      %p132 = scmp.eq.s32.totalorder %s28, 0
      %p133 = por %p131, %p132
      %p134 = scmp.ne.s32.totalorder %s122, %s123
      %p135 = scmp.eq.s32.totalorder %s29, 1
      %p136 = por %p134, %p135
      %p138 = scmp.ne.s32.totalorder %s123, %s137
      %p139 = scmp.eq.s32.totalorder %s29, 0
      %p140 = por %p138, %p139
      %s142 = sadd.s32 %s141, 1
      %p145 = scmp.eq.s32.totalorder %s23, 1
      %p146 = scmp.ne.s32.totalorder %s141, %s143
      %p147 = scmp.eq.s32.totalorder %s23, 0
      %p148 = por %p146, %p147
      %p149 = scmp.ne.s32.totalorder %s141, %s143
      %p150 = scmp.eq.s32.totalorder %s28, 1
      %p151 = por %p149, %p150
      %p152 = scmp.ne.s32.totalorder %s143, %s144
      %p153 = scmp.eq.s32.totalorder %s28, 0
      %p154 = por %p152, %p153
      %p155 = scmp.ne.s32.totalorder %s143, %s144
      %p156 = scmp.eq.s32.totalorder %s29, 1
      %p157 = por %p155, %p156
      %p159 = scmp.ne.s32.totalorder %s144, %s158
      %p160 = scmp.eq.s32.totalorder %s29, 0
      %p161 = por %p159, %p160
      %s163 = sadd.s32 %s162, 1
      %p166 = scmp.eq.s32.totalorder %s23, 1
      %p167 = scmp.ne.s32.totalorder %s162, %s164
      %p168 = scmp.eq.s32.totalorder %s23, 0
      %p169 = por %p167, %p168
      %p170 = scmp.ne.s32.totalorder %s162, %s164
      %p171 = scmp.eq.s32.totalorder %s28, 1
      %p172 = por %p170, %p171
      %p173 = scmp.ne.s32.totalorder %s164, %s165
      %p174 = scmp.eq.s32.totalorder %s28, 0
      %p175 = por %p173, %p174
      %p176 = scmp.ne.s32.totalorder %s164, %s165
      %p177 = scmp.eq.s32.totalorder %s29, 1
      %p178 = por %p176, %p177
      %p180 = scmp.ne.s32.totalorder %s165, %s179
      %p181 = scmp.eq.s32.totalorder %s29, 0
      %p182 = por %p180, %p181
      %s184 = sadd.s32 %s183, 1
      %p187 = scmp.eq.s32.totalorder %s23, 1
      %p188 = scmp.ne.s32.totalorder %s183, %s185
      %p189 = scmp.eq.s32.totalorder %s23, 0
      %p190 = por %p188, %p189
      %p191 = scmp.ne.s32.totalorder %s183, %s185
      %p192 = scmp.eq.s32.totalorder %s28, 1
      %p193 = por %p191, %p192
      %p194 = scmp.ne.s32.totalorder %s185, %s186
      %p195 = scmp.eq.s32.totalorder %s28, 0
      %p196 = por %p194, %p195
      %p197 = scmp.ne.s32.totalorder %s185, %s186
      %p198 = scmp.eq.s32.totalorder %s29, 1
      %p199 = por %p197, %p198
      %p201 = scmp.ne.s32.totalorder %s186, %s200
      %p202 = scmp.eq.s32.totalorder %s29, 0
      %p203 = por %p201, %p202
      %s205 = sadd.s32 %s204, 1
      %p208 = scmp.eq.s32.totalorder %s23, 1
      %p209 = scmp.ne.s32.totalorder %s204, %s206
      %p210 = scmp.eq.s32.totalorder %s23, 0
      %p211 = por %p209, %p210
      %p212 = scmp.ne.s32.totalorder %s204, %s206
      %p213 = scmp.eq.s32.totalorder %s28, 1
      %p214 = por %p212, %p213
      %p215 = scmp.ne.s32.totalorder %s206, %s207
      %p216 = scmp.eq.s32.totalorder %s28, 0
      %p217 = por %p215, %p216
      %p218 = scmp.ne.s32.totalorder %s206, %s207
      %p219 = scmp.eq.s32.totalorder %s29, 1
      %p220 = por %p218, %p219
      %p222 = scmp.ne.s32.totalorder %s207, %s221
      %p223 = scmp.eq.s32.totalorder %s29, 0
      %p224 = por %p222, %p223
      %s225 = ssub.s32 %s23, %s30
      %p226 = scmp.eq.s32.totalorder %s225, 0
      %s228 = sadd.s32 %s227, 1
      %s229 = scalar_select %p226, %s227, %s228
      %p232 = pneg %p226
      %p233 = scmp.eq.s32.totalorder %s23, 1
      %p234 = por %p232, %p233
      %p235 = scmp.ne.s32.totalorder %s227, %s230
      %p236 = scmp.eq.s32.totalorder %s23, 0
      %p237 = por %p235, %p236
      %p238 = scmp.ne.s32.totalorder %s227, %s230
      %p239 = scmp.eq.s32.totalorder %s28, 1
      %p240 = por %p238, %p239
      %p241 = scmp.ne.s32.totalorder %s230, %s231
      %p242 = scmp.eq.s32.totalorder %s28, 0
      %p243 = por %p241, %p242
      %p244 = scmp.ne.s32.totalorder %s230, %s231
      %p245 = scmp.eq.s32.totalorder %s29, 1
      %p246 = por %p244, %p245
      %p248 = scmp.ne.s32.totalorder %s231, %s247
      %p249 = scmp.eq.s32.totalorder %s29, 0
      %p250 = por %p248, %p249
      %p251 = scmp.le.s32.totalorder 1, %s23
      %p252 = scmp.lt.s32.totalorder %s23, 3
      %p253 = pnand %p251, %p252
      %p254 = pneg %p253
      // Predicated region
      $region9: #{tpu_custom_call.1} parent=5 // pred_check
        _
      $region10: #{tpu_custom_call.1} parent=5 // pred_check_branch
        %256 = sbr.rel (%p253) target = $region12
      $region11: #{tpu_custom_call.1} parent=5 // pred_region
        %s257 = ssub.s32 %s23, 1
        // Predicated region
        $region13: #{tpu_custom_call.1} parent=11 // pred_check
          %p258 = pneg %p70
        $region14: #{tpu_custom_call.1} parent=11 // pred_check_branch
          %260 = sbr.rel (%p258) target = $region16
        $region15: #{tpu_custom_call.1} parent=11 // pred_region
          %s262 = ssub.s32 64, 64
          %263 = vsyncadd [#allocation4], %s262
          %266 = dma.hbm_to_smem %s1, 64, [#allocation6], [#allocation4]
        $region16: #{tpu_custom_call.1} parent=11 // pred_fallthru
          _
        // Predicated region
        $region17: #{tpu_custom_call.1} parent=11 // pred_check
          %p267 = pneg %p91
        $region18: #{tpu_custom_call.1} parent=11 // pred_check_branch
          %269 = sbr.rel (%p267) target = $region20
        $region19: #{tpu_custom_call.1} parent=11 // pred_region
          %s271 = ssub.s32 16, 16
          %272 = vsyncadd [#allocation5], %s271
          %s274 = sshll.u32 %s2, 4
          %s275 = int_to_ptr.vmem [resolvable:$true] %s274
          %277 = dma.vmem_to_smem %s275, 16, [#allocation7], [#allocation5]
        $region20: #{tpu_custom_call.1} parent=11 // pred_fallthru
          _
        // Predicated region
        $region21: #{tpu_custom_call.1} parent=11 // pred_check
          %p278 = pneg %p112
        $region22: #{tpu_custom_call.1} parent=11 // pred_check_branch
          %280 = sbr.rel (%p278) target = $region24
        $region23: #{tpu_custom_call.1} parent=11 // pred_region
          %s282 = ssub.s32 16, 16
          %283 = vsyncadd [#allocation9], %s282
          %286 = dma.hbm_to_smem %s3, 16, [#allocation8], [#allocation9]
        $region24: #{tpu_custom_call.1} parent=11 // pred_fallthru
          _
        // Predicated region
        $region25: #{tpu_custom_call.1} parent=11 // pred_check
          %p287 = pneg %p133
        $region26: #{tpu_custom_call.1} parent=11 // pred_check_branch
          %289 = sbr.rel (%p287) target = $region28
        $region27: #{tpu_custom_call.1} parent=11 // pred_region
          %s291 = ssub.s32 16, 16
          %292 = vsyncadd [#allocation9], %s291
          %295 = dma.hbm_to_smem %s4, 16, [#allocation10], [#allocation9]
        $region28: #{tpu_custom_call.1} parent=11 // pred_fallthru
          _
        // Predicated region
        $region29: #{tpu_custom_call.1} parent=11 // pred_check
          %p296 = pneg %p154
        $region30: #{tpu_custom_call.1} parent=11 // pred_check_branch
          %298 = sbr.rel (%p296) target = $region32
        $region31: #{tpu_custom_call.1} parent=11 // pred_region
          %s300 = ssub.s32 128, 128
          %301 = vsyncadd [#allocation12], %s300
          %s303 = sshll.u32 %s5, 4
          %s304 = int_to_ptr.vmem [resolvable:$true] %s303
          %306 = dma.vmem_to_smem %s304, 128, [#allocation11], [#allocation12]
        $region32: #{tpu_custom_call.1} parent=11 // pred_fallthru
          _
        // Predicated region
        $region33: #{tpu_custom_call.1} parent=11 // pred_check
          %p307 = pneg %p175
        $region34: #{tpu_custom_call.1} parent=11 // pred_check_branch
          %309 = sbr.rel (%p307) target = $region36
        $region35: #{tpu_custom_call.1} parent=11 // pred_region
          %s311 = ssub.s32 16, 16
          %312 = vsyncadd [#allocation12], %s311
          %s314 = sshll.u32 %s6, 4
          %s315 = int_to_ptr.vmem [resolvable:$true] %s314
          %317 = dma.vmem_to_smem %s315, 16, [#allocation13], [#allocation12]
        $region36: #{tpu_custom_call.1} parent=11 // pred_fallthru
          _
        // Predicated region
        $region37: #{tpu_custom_call.1} parent=11 // pred_check
          %p318 = pneg %p196
        $region38: #{tpu_custom_call.1} parent=11 // pred_check_branch
          %320 = sbr.rel (%p318) target = $region40
        $region39: #{tpu_custom_call.1} parent=11 // pred_region
          %s322 = ssub.s32 16, 16
          %323 = vsyncadd [#allocation15], %s322
          %s325 = sshll.u32 %s7, 4
          %s326 = int_to_ptr.vmem [resolvable:$true] %s325
          %328 = dma.vmem_to_smem %s326, 16, [#allocation14], [#allocation15]
        $region40: #{tpu_custom_call.1} parent=11 // pred_fallthru
          _
        // Predicated region
        $region41: #{tpu_custom_call.1} parent=11 // pred_check
          %p329 = pneg %p217
        $region42: #{tpu_custom_call.1} parent=11 // pred_check_branch
          %331 = sbr.rel (%p329) target = $region44
        $region43: #{tpu_custom_call.1} parent=11 // pred_region
          %s333 = ssub.s32 16, 16
          %334 = vsyncadd [#allocation15], %s333
          %s336 = sshll.u32 %s8, 4
          %s337 = int_to_ptr.vmem [resolvable:$true] %s336
          %339 = dma.vmem_to_smem %s337, 16, [#allocation16], [#allocation15]
        $region44: #{tpu_custom_call.1} parent=11 // pred_fallthru
          _
      $region12: #{tpu_custom_call.1} parent=5 // pred_fallthru
        _
      %p340 = scmp.lt.s32.totalorder %s23, 2
      // Predicated region
      $region45: #{tpu_custom_call.1} parent=5 // pred_check
        %p341 = pneg %p340
      $region46: #{tpu_custom_call.1} parent=5 // pred_check_branch
        %343 = sbr.rel (%p341) target = $region48
      $region47: #{tpu_custom_call.1} parent=5 // pred_region
        // Predicated region
        $region49: #{tpu_custom_call.1} parent=47 // pred_check
          %p344 = pneg %p43
        $region50: #{tpu_custom_call.1} parent=47 // pred_check_branch
          %346 = sbr.rel (%p344) target = $region52
        $region51: #{tpu_custom_call.1} parent=47 // pred_region
          %s347 = sand.u32 %s33, 1
          %s348 = scalar_lea.sflag [#allocation3], %s347
          %s349 = sand.u32 %s33, 1
          %s350 = smul.addr %s349, 32
          %s351 = scalar_lea.vmem [#allocation2], %s350
          %s352 = smul.u32 2, %s23
          %s354 = ssub.s32 512, 512
          %355 = vsyncadd %s348, %s354
          %s356 = smul.addr %s352, 128
          %s357 = scalar_lea.hbm %s0, %s356
          %s358 = sshll.u32 %s351, 4
          %s359 = int_to_ptr.vmem [resolvable:$true] %s358
          %364 = dma.hbm_to_vmem [thread:$0]  %s357, 512, %s359, %s348, 512, 256, 16
        $region52: #{tpu_custom_call.1} parent=47 // pred_fallthru
          _
      $region48: #{tpu_custom_call.1} parent=5 // pred_fallthru
        _
      %p365 = scmp.le.s32.totalorder 1, %s23
      %p366 = scmp.lt.s32.totalorder %s23, 3
      %p367 = pnand %p365, %p366
      %p368 = pneg %p367
      // Predicated region
      $region53: #{tpu_custom_call.1} parent=5 // pred_check
        _
      $region54: #{tpu_custom_call.1} parent=5 // pred_check_branch
        %370 = sbr.rel (%p367) target = $region56
      $region55: #{tpu_custom_call.1} parent=5 // pred_region
        %s371 = ssub.s32 %s23, 1
        %s372 = sand.u32 %s36, 1
        %s373 = scalar_lea.sflag [#allocation3], %s372
        %s374 = sand.u32 %s36, 1
        %s375 = smul.addr %s374, 32
        %s376 = scalar_lea.vmem [#allocation2], %s375
        // Predicated region
        $region57: #{tpu_custom_call.1} parent=55 // pred_check
          %p377 = pneg %p49
        $region58: #{tpu_custom_call.1} parent=55 // pred_check_branch
          %379 = sbr.rel (%p377) target = $region60
        $region59: #{tpu_custom_call.1} parent=55 // pred_region
          %380 = dma.done %s373, 512
        $region60: #{tpu_custom_call.1} parent=55 // pred_fallthru
          _
        // Predicated region
        $region61: #{tpu_custom_call.1} parent=55 // pred_check
          %p381 = pneg %p70
        $region62: #{tpu_custom_call.1} parent=55 // pred_check_branch
          %383 = sbr.rel (%p381) target = $region64
        $region63: #{tpu_custom_call.1} parent=55 // pred_region
          %384 = dma.done [#allocation4], 64
        $region64: #{tpu_custom_call.1} parent=55 // pred_fallthru
          _
        // Predicated region
        $region65: #{tpu_custom_call.1} parent=55 // pred_check
          %p385 = pneg %p91
        $region66: #{tpu_custom_call.1} parent=55 // pred_check_branch
          %387 = sbr.rel (%p385) target = $region68
        $region67: #{tpu_custom_call.1} parent=55 // pred_region
          %388 = dma.done [#allocation5], 16
        $region68: #{tpu_custom_call.1} parent=55 // pred_fallthru
          _
        // Predicated region
        $region69: #{tpu_custom_call.1} parent=55 // pred_check
          %p389 = pneg %p112
        $region70: #{tpu_custom_call.1} parent=55 // pred_check_branch
          %391 = sbr.rel (%p389) target = $region72
        $region71: #{tpu_custom_call.1} parent=55 // pred_region
          %392 = dma.done [#allocation9], 16
        $region72: #{tpu_custom_call.1} parent=55 // pred_fallthru
          _
        // Predicated region
        $region73: #{tpu_custom_call.1} parent=55 // pred_check
          %p393 = pneg %p133
        $region74: #{tpu_custom_call.1} parent=55 // pred_check_branch
          %395 = sbr.rel (%p393) target = $region76
        $region75: #{tpu_custom_call.1} parent=55 // pred_region
          %396 = dma.done [#allocation9], 16
        $region76: #{tpu_custom_call.1} parent=55 // pred_fallthru
          _
        // Predicated region
        $region77: #{tpu_custom_call.1} parent=55 // pred_check
          %p397 = pneg %p154
        $region78: #{tpu_custom_call.1} parent=55 // pred_check_branch
          %399 = sbr.rel (%p397) target = $region80
        $region79: #{tpu_custom_call.1} parent=55 // pred_region
          %400 = dma.done [#allocation12], 128
        $region80: #{tpu_custom_call.1} parent=55 // pred_fallthru
          _
        // Predicated region
        $region81: #{tpu_custom_call.1} parent=55 // pred_check
          %p401 = pneg %p175
        $region82: #{tpu_custom_call.1} parent=55 // pred_check_branch
          %403 = sbr.rel (%p401) target = $region84
        $region83: #{tpu_custom_call.1} parent=55 // pred_region
          %404 = dma.done [#allocation12], 16
        $region84: #{tpu_custom_call.1} parent=55 // pred_fallthru
          _
        // Predicated region
        $region85: #{tpu_custom_call.1} parent=55 // pred_check
          %p405 = pneg %p196
        $region86: #{tpu_custom_call.1} parent=55 // pred_check_branch
          %407 = sbr.rel (%p405) target = $region88
        $region87: #{tpu_custom_call.1} parent=55 // pred_region
          %408 = dma.done [#allocation15], 16
        $region88: #{tpu_custom_call.1} parent=55 // pred_fallthru
          _
        // Predicated region
        $region89: #{tpu_custom_call.1} parent=55 // pred_check
          %p409 = pneg %p217
        $region90: #{tpu_custom_call.1} parent=55 // pred_check_branch
          %411 = sbr.rel (%p409) target = $region92
        $region91: #{tpu_custom_call.1} parent=55 // pred_region
          %412 = dma.done [#allocation15], 16
        $region92: #{tpu_custom_call.1} parent=55 // pred_fallthru
          _
        %413 = sfence
        %s414 = sand.u32 %s36, 1
        %s415 = scalar_lea.sflag [#allocation3], %s414
        %s416 = sand.u32 %s36, 1
        %s417 = smul.addr %s416, 32
        %s418 = scalar_lea.vmem [#allocation2], %s417
        %p419 = pneg %p49
        %p420 = pneg %p46
        %p421 = pneg %p70
        %p422 = pneg %p67
        %p423 = pneg %p91
        %p424 = pneg %p88
        %p425 = pneg %p112
        %p426 = pneg %p109
        %p427 = pneg %p133
        %p428 = pneg %p130
        %p429 = pneg %p154
        %p430 = pneg %p151
        %p431 = pneg %p175
        %p432 = pneg %p172
        %p433 = pneg %p196
        %p434 = pneg %p193
        %p435 = pneg %p217
        %p436 = pneg %p214
        %p437 = pneg %p243
        %p438 = pneg %p240
        %s439 = sand.u32 %s230, 1
        %s440 = sand.u32 %s230, 1
        %s441 = smul.addr %s440, 256
        %s442 = scalar_lea.vmem [#allocation17], %s441
        %s443 = smul.u32 2, %s28
        %s444 = smul.u32 2, %s28
        loop: start=0, step=1, limit=2
        $region93: #{tpu_custom_call.1} parent=55 // loop_pre_header
          _
        $region94: #{tpu_custom_call.1} parent=55 // loop_header
          %s446 = sphi 0, %s450
          %p447 = scmp.ge.s32.totalorder %s446, 2
        $region95: #{tpu_custom_call.1} parent=55 // loop_header_branch
          %449 = sbr.rel (%p447) target = $region99
        $region96: #{tpu_custom_call.1} parent=55 // loop_body
          %s451 = smul.u32 %s446, 128
          %s452 = sshra.s32 %s451, 7
          %s453 = sand.u32 %s451, 127
          %s454 = smul.addr %s452, 8
          %s455 = scalar_lea.vmem %s376, %s454 [#allocation2]
          %v456 = vld [vmem:[%s455] sm:$0xff]
          %v457 = vld [vmem:[%s455 + $0x10] sm:$0xff]
          %s458 = sld [smem:[#allocation6]]
          %v459 = vstv %s458
          %v460 = vmul.f32 %v459, %v456
          %v461 = vmul.f32 %v459, %v457
          %s462 = sld [smem:[#allocation6 + $0x1]]
          %v463 = vstv %s462
          %v464 = vmul.f32 %v463, %v456
          %v465 = vmul.f32 %v463, %v457
          %vm468 = vcmask 1046528
          %v469 = vrot.slane %v464, 1
          %v470 = vrot.slane %v465, 1
          %v471 = vsel %vm468, %v469, %v470
          %v474 = vadd.f32 %v460, %v471
          %v475 = vadd.f32 %v461, %v470
          %s476 = sld [smem:[#allocation6 + $0x2]]
          %v477 = vstv %s476
          %v478 = vmul.f32 %v477, %v456
          %v479 = vmul.f32 %v477, %v457
          %vm482 = vcmask 1045504
          %v483 = vrot.slane %v478, 2
          %v484 = vrot.slane %v479, 2
          %v485 = vsel %vm482, %v483, %v484
          %v488 = vadd.f32 %v474, %v485
          %v489 = vadd.f32 %v475, %v484
          %s490 = sld [smem:[#allocation7]]
          %v491 = vstv %s490
          %v492 = vadd.f32 %v488, %v491
          %v493 = vadd.f32 %v489, %v491
          %s494 = sld [smem:[#allocation6 + $0x80]]
          %v495 = vstv %s494
          %v496 = vmul.f32 %v495, %v456
          %v497 = vmul.f32 %v495, %v457
          %s498 = sld [smem:[#allocation6 + $0x81]]
          %v499 = vstv %s498
          %v500 = vmul.f32 %v499, %v456
          %v501 = vmul.f32 %v499, %v457
          %v504 = vrot.slane %v500, 1
          %v505 = vrot.slane %v501, 1
          %v506 = vsel %vm468, %v504, %v505
          %v509 = vadd.f32 %v496, %v506
          %v510 = vadd.f32 %v497, %v505
          %s511 = sld [smem:[#allocation6 + $0x82]]
          %v512 = vstv %s511
          %v513 = vmul.f32 %v512, %v456
          %v514 = vmul.f32 %v512, %v457
          %v517 = vrot.slane %v513, 2
          %v518 = vrot.slane %v514, 2
          %v519 = vsel %vm482, %v517, %v518
          %v522 = vadd.f32 %v509, %v519
          %v523 = vadd.f32 %v510, %v518
          %s524 = sld [smem:[#allocation7 + $0x1]]
          %v525 = vstv %s524
          %v526 = vadd.f32 %v522, %v525
          %v527 = vadd.f32 %v523, %v525
          %s528 = sld [smem:[#allocation6 + $0x100]]
          %v529 = vstv %s528
          %v530 = vmul.f32 %v529, %v456
          %v531 = vmul.f32 %v529, %v457
          %s532 = sld [smem:[#allocation6 + $0x101]]
          %v533 = vstv %s532
          %v534 = vmul.f32 %v533, %v456
          %v535 = vmul.f32 %v533, %v457
          %v538 = vrot.slane %v534, 1
          %v539 = vrot.slane %v535, 1
          %v540 = vsel %vm468, %v538, %v539
          %v543 = vadd.f32 %v530, %v540
          %v544 = vadd.f32 %v531, %v539
          %s545 = sld [smem:[#allocation6 + $0x102]]
          %v546 = vstv %s545
          %v547 = vmul.f32 %v546, %v456
          %v548 = vmul.f32 %v546, %v457
          %v551 = vrot.slane %v547, 2
          %v552 = vrot.slane %v548, 2
          %v553 = vsel %vm482, %v551, %v552
          %v556 = vadd.f32 %v543, %v553
          %v557 = vadd.f32 %v544, %v552
          %s558 = sld [smem:[#allocation7 + $0x2]]
          %v559 = vstv %s558
          %v560 = vadd.f32 %v556, %v559
          %v561 = vadd.f32 %v557, %v559
          %s562 = sld [smem:[#allocation6 + $0x180]]
          %v563 = vstv %s562
          %v564 = vmul.f32 %v563, %v456
          %v565 = vmul.f32 %v563, %v457
          %s566 = sld [smem:[#allocation6 + $0x181]]
          %v567 = vstv %s566
          %v568 = vmul.f32 %v567, %v456
          %v569 = vmul.f32 %v567, %v457
          %v572 = vrot.slane %v568, 1
          %v573 = vrot.slane %v569, 1
          %v574 = vsel %vm468, %v572, %v573
          %v577 = vadd.f32 %v564, %v574
          %v578 = vadd.f32 %v565, %v573
          %s579 = sld [smem:[#allocation6 + $0x182]]
          %v580 = vstv %s579
          %v581 = vmul.f32 %v580, %v456
          %v582 = vmul.f32 %v580, %v457
          %v585 = vrot.slane %v581, 2
          %v586 = vrot.slane %v582, 2
          %v587 = vsel %vm482, %v585, %v586
          %v590 = vadd.f32 %v577, %v587
          %v591 = vadd.f32 %v578, %v586
          %s592 = sld [smem:[#allocation7 + $0x3]]
          %v593 = vstv %s592
          %v594 = vadd.f32 %v590, %v593
          %v595 = vadd.f32 %v591, %v593
          %v596 = vsel %vm482, %v493, 0.0
          %v597 = vadd.f32 %v492, %v596
          %v598 = vrot.slane %v597, 4
          %v599 = vadd.f32 %v597, %v598
          %v600 = vrot.slane %v599, 2
          %v601 = vadd.f32 %v599, %v600
          %v602 = vrot.slane %v601, 1
          %v603 = vadd.f32 %v601, %v602
          %v604 = vsel %vm482, %v527, 0.0
          %v605 = vadd.f32 %v526, %v604
          %v606 = vrot.slane %v605, 4
          %v607 = vadd.f32 %v605, %v606
          %v608 = vrot.slane %v607, 2
          %v609 = vadd.f32 %v607, %v608
          %v610 = vrot.slane %v609, 1
          %v611 = vadd.f32 %v609, %v610
          %v612 = vadd.f32 %v603, %v611
          %v613 = vmul.f32 %v612, 0.035714287
          %v614 = vsub.f32 %v492, %v613
          %v615 = vsub.f32 %v493, %v613
          %v616 = vmul.f32 %v614, %v614
          %v617 = vmul.f32 %v615, %v615
          %v618 = vsel %vm482, %v617, 0.0
          %v619 = vadd.f32 %v616, %v618
          %v620 = vrot.slane %v619, 4
          %v621 = vadd.f32 %v619, %v620
          %v622 = vrot.slane %v621, 2
          %v623 = vadd.f32 %v621, %v622
          %v624 = vrot.slane %v623, 1
          %v625 = vadd.f32 %v623, %v624
          %v626 = vsub.f32 %v526, %v613
          %v627 = vsub.f32 %v527, %v613
          %v628 = vmul.f32 %v626, %v626
          %v629 = vmul.f32 %v627, %v627
          %v630 = vsel %vm482, %v629, 0.0
          %v631 = vadd.f32 %v628, %v630
          %v632 = vrot.slane %v631, 4
          %v633 = vadd.f32 %v631, %v632
          %v634 = vrot.slane %v633, 2
          %v635 = vadd.f32 %v633, %v634
          %v636 = vrot.slane %v635, 1
          %v637 = vadd.f32 %v635, %v636
          %v638 = vadd.f32 %v625, %v637
          %v639 = vmul.f32 %v638, 0.035714287
          %v640 = vadd.f32 %v639, 1e-05
          %v641 = vrsqrt.pop %v640
          %s642 = sld [smem:[#allocation8]]
          %v643 = vstv %s642
          %v644 = vmul.f32 %v643, %v641
          %v645 = vmul.f32 %v614, %v644
          %v646 = vmul.f32 %v615, %v644
          %s647 = sld [smem:[#allocation10]]
          %v648 = vstv %s647
          %v649 = vadd.f32 %v645, %v648
          %v650 = vadd.f32 %v646, %v648
          %v651 = vmax.f32 %v649, 0.0
          %v652 = vmax.f32 %v650, 0.0
          %s653 = sld [smem:[#allocation8 + $0x1]]
          %v654 = vstv %s653
          %v655 = vmul.f32 %v654, %v641
          %v656 = vmul.f32 %v626, %v655
          %v657 = vmul.f32 %v627, %v655
          %s658 = sld [smem:[#allocation10 + $0x1]]
          %v659 = vstv %s658
          %v660 = vadd.f32 %v656, %v659
          %v661 = vadd.f32 %v657, %v659
          %v662 = vmax.f32 %v660, 0.0
          %v663 = vmax.f32 %v661, 0.0
          %v664 = vsel %vm482, %v561, 0.0
          %v665 = vadd.f32 %v560, %v664
          %v666 = vrot.slane %v665, 4
          %v667 = vadd.f32 %v665, %v666
          %v668 = vrot.slane %v667, 2
          %v669 = vadd.f32 %v667, %v668
          %v670 = vrot.slane %v669, 1
          %v671 = vadd.f32 %v669, %v670
          %v672 = vsel %vm482, %v595, 0.0
          %v673 = vadd.f32 %v594, %v672
          %v674 = vrot.slane %v673, 4
          %v675 = vadd.f32 %v673, %v674
          %v676 = vrot.slane %v675, 2
          %v677 = vadd.f32 %v675, %v676
          %v678 = vrot.slane %v677, 1
          %v679 = vadd.f32 %v677, %v678
          %v680 = vadd.f32 %v671, %v679
          %v681 = vmul.f32 %v680, 0.035714287
          %v682 = vsub.f32 %v560, %v681
          %v683 = vsub.f32 %v561, %v681
          %v684 = vmul.f32 %v682, %v682
          %v685 = vmul.f32 %v683, %v683
          %v686 = vsel %vm482, %v685, 0.0
          %v687 = vadd.f32 %v684, %v686
          %v688 = vrot.slane %v687, 4
          %v689 = vadd.f32 %v687, %v688
          %v690 = vrot.slane %v689, 2
          %v691 = vadd.f32 %v689, %v690
          %v692 = vrot.slane %v691, 1
          %v693 = vadd.f32 %v691, %v692
          %v694 = vsub.f32 %v594, %v681
          %v695 = vsub.f32 %v595, %v681
          %v696 = vmul.f32 %v694, %v694
          %v697 = vmul.f32 %v695, %v695
          %v698 = vsel %vm482, %v697, 0.0
          %v699 = vadd.f32 %v696, %v698
          %v700 = vrot.slane %v699, 4
          %v701 = vadd.f32 %v699, %v700
          %v702 = vrot.slane %v701, 2
          %v703 = vadd.f32 %v701, %v702
          %v704 = vrot.slane %v703, 1
          %v705 = vadd.f32 %v703, %v704
          %v706 = vadd.f32 %v693, %v705
          %v707 = vmul.f32 %v706, 0.035714287
          %v708 = vadd.f32 %v707, 1e-05
          %v709 = vrsqrt.pop %v708
          %s710 = sld [smem:[#allocation8 + $0x2]]
          %v711 = vstv %s710
          %v712 = vmul.f32 %v711, %v709
          %v713 = vmul.f32 %v682, %v712
          %v714 = vmul.f32 %v683, %v712
          %s715 = sld [smem:[#allocation10 + $0x2]]
          %v716 = vstv %s715
          %v717 = vadd.f32 %v713, %v716
          %v718 = vadd.f32 %v714, %v716
          %v719 = vmax.f32 %v717, 0.0
          %v720 = vmax.f32 %v718, 0.0
          %s721 = sld [smem:[#allocation8 + $0x3]]
          %v722 = vstv %s721
          %v723 = vmul.f32 %v722, %v709
          %v724 = vmul.f32 %v694, %v723
          %v725 = vmul.f32 %v695, %v723
          %s726 = sld [smem:[#allocation10 + $0x3]]
          %v727 = vstv %s726
          %v728 = vadd.f32 %v724, %v727
          %v729 = vadd.f32 %v725, %v727
          %v730 = vmax.f32 %v728, 0.0
          %v731 = vmax.f32 %v729, 0.0
          %s732 = sld [smem:[#allocation11]]
          %v733 = vstv %s732
          %v734 = vmul.f32 %v733, %v651
          %v735 = vmul.f32 %v733, %v652
          %s736 = sld [smem:[#allocation11 + $0x1]]
          %v737 = vstv %s736
          %v738 = vmul.f32 %v737, %v651
          %v739 = vmul.f32 %v737, %v652
          %v742 = vrot.slane %v738, 1
          %v743 = vrot.slane %v739, 1
          %v744 = vsel %vm468, %v742, %v743
          %v747 = vadd.f32 %v734, %v744
          %v748 = vadd.f32 %v735, %v743
          %s749 = sld [smem:[#allocation11 + $0x2]]
          %v750 = vstv %s749
          %v751 = vmul.f32 %v750, %v662
          %v752 = vmul.f32 %v750, %v663
          %v753 = vadd.f32 %v747, %v751
          %v754 = vadd.f32 %v748, %v752
          %s755 = sld [smem:[#allocation11 + $0x3]]
          %v756 = vstv %s755
          %v757 = vmul.f32 %v756, %v662
          %v758 = vmul.f32 %v756, %v663
          %v761 = vrot.slane %v757, 1
          %v762 = vrot.slane %v758, 1
          %v763 = vsel %vm468, %v761, %v762
          %v766 = vadd.f32 %v753, %v763
          %v767 = vadd.f32 %v754, %v762
          %s768 = sld [smem:[#allocation11 + $0x4]]
          %v769 = vstv %s768
          %v770 = vmul.f32 %v769, %v719
          %v771 = vmul.f32 %v769, %v720
          %v772 = vadd.f32 %v766, %v770
          %v773 = vadd.f32 %v767, %v771
          %s774 = sld [smem:[#allocation11 + $0x5]]
          %v775 = vstv %s774
          %v776 = vmul.f32 %v775, %v719
          %v777 = vmul.f32 %v775, %v720
          %v780 = vrot.slane %v776, 1
          %v781 = vrot.slane %v777, 1
          %v782 = vsel %vm468, %v780, %v781
          %v785 = vadd.f32 %v772, %v782
          %v786 = vadd.f32 %v773, %v781
          %s787 = sld [smem:[#allocation11 + $0x6]]
          %v788 = vstv %s787
          %v789 = vmul.f32 %v788, %v730
          %v790 = vmul.f32 %v788, %v731
          %v791 = vadd.f32 %v785, %v789
          %v792 = vadd.f32 %v786, %v790
          %s793 = sld [smem:[#allocation11 + $0x7]]
          %v794 = vstv %s793
          %v795 = vmul.f32 %v794, %v730
          %v796 = vmul.f32 %v794, %v731
          %v799 = vrot.slane %v795, 1
          %v800 = vrot.slane %v796, 1
          %v801 = vsel %vm468, %v799, %v800
          %v804 = vadd.f32 %v791, %v801
          %v805 = vadd.f32 %v792, %v800
          %s806 = sld [smem:[#allocation13]]
          %v807 = vstv %s806
          %v808 = vadd.f32 %v804, %v807
          %v809 = vadd.f32 %v805, %v807
          %s810 = sld [smem:[#allocation11 + $0x80]]
          %v811 = vstv %s810
          %v812 = vmul.f32 %v811, %v651
          %v813 = vmul.f32 %v811, %v652
          %s814 = sld [smem:[#allocation11 + $0x81]]
          %v815 = vstv %s814
          %v816 = vmul.f32 %v815, %v651
          %v817 = vmul.f32 %v815, %v652
          %v820 = vrot.slane %v816, 1
          %v821 = vrot.slane %v817, 1
          %v822 = vsel %vm468, %v820, %v821
          %v825 = vadd.f32 %v812, %v822
          %v826 = vadd.f32 %v813, %v821
          %s827 = sld [smem:[#allocation11 + $0x82]]
          %v828 = vstv %s827
          %v829 = vmul.f32 %v828, %v662
          %v830 = vmul.f32 %v828, %v663
          %v831 = vadd.f32 %v825, %v829
          %v832 = vadd.f32 %v826, %v830
          %s833 = sld [smem:[#allocation11 + $0x83]]
          %v834 = vstv %s833
          %v835 = vmul.f32 %v834, %v662
          %v836 = vmul.f32 %v834, %v663
          %v839 = vrot.slane %v835, 1
          %v840 = vrot.slane %v836, 1
          %v841 = vsel %vm468, %v839, %v840
          %v844 = vadd.f32 %v831, %v841
          %v845 = vadd.f32 %v832, %v840
          %s846 = sld [smem:[#allocation11 + $0x84]]
          %v847 = vstv %s846
          %v848 = vmul.f32 %v847, %v719
          %v849 = vmul.f32 %v847, %v720
          %v850 = vadd.f32 %v844, %v848
          %v851 = vadd.f32 %v845, %v849
          %s852 = sld [smem:[#allocation11 + $0x85]]
          %v853 = vstv %s852
          %v854 = vmul.f32 %v853, %v719
          %v855 = vmul.f32 %v853, %v720
          %v858 = vrot.slane %v854, 1
          %v859 = vrot.slane %v855, 1
          %v860 = vsel %vm468, %v858, %v859
          %v863 = vadd.f32 %v850, %v860
          %v864 = vadd.f32 %v851, %v859
          %s865 = sld [smem:[#allocation11 + $0x86]]
          %v866 = vstv %s865
          %v867 = vmul.f32 %v866, %v730
          %v868 = vmul.f32 %v866, %v731
          %v869 = vadd.f32 %v863, %v867
          %v870 = vadd.f32 %v864, %v868
          %s871 = sld [smem:[#allocation11 + $0x87]]
          %v872 = vstv %s871
          %v873 = vmul.f32 %v872, %v730
          %v874 = vmul.f32 %v872, %v731
          %v877 = vrot.slane %v873, 1
          %v878 = vrot.slane %v874, 1
          %v879 = vsel %vm468, %v877, %v878
          %v882 = vadd.f32 %v869, %v879
          %v883 = vadd.f32 %v870, %v878
          %s884 = sld [smem:[#allocation13 + $0x1]]
          %v885 = vstv %s884
          %v886 = vadd.f32 %v882, %v885
          %v887 = vadd.f32 %v883, %v885
          %s888 = sld [smem:[#allocation11 + $0x100]]
          %v889 = vstv %s888
          %v890 = vmul.f32 %v889, %v651
          %v891 = vmul.f32 %v889, %v652
          %s892 = sld [smem:[#allocation11 + $0x101]]
          %v893 = vstv %s892
          %v894 = vmul.f32 %v893, %v651
          %v895 = vmul.f32 %v893, %v652
          %v898 = vrot.slane %v894, 1
          %v899 = vrot.slane %v895, 1
          %v900 = vsel %vm468, %v898, %v899
          %v903 = vadd.f32 %v890, %v900
          %v904 = vadd.f32 %v891, %v899
          %s905 = sld [smem:[#allocation11 + $0x102]]
          %v906 = vstv %s905
          %v907 = vmul.f32 %v906, %v662
          %v908 = vmul.f32 %v906, %v663
          %v909 = vadd.f32 %v903, %v907
          %v910 = vadd.f32 %v904, %v908
          %s911 = sld [smem:[#allocation11 + $0x103]]
          %v912 = vstv %s911
          %v913 = vmul.f32 %v912, %v662
          %v914 = vmul.f32 %v912, %v663
          %v917 = vrot.slane %v913, 1
          %v918 = vrot.slane %v914, 1
          %v919 = vsel %vm468, %v917, %v918
          %v922 = vadd.f32 %v909, %v919
          %v923 = vadd.f32 %v910, %v918
          %s924 = sld [smem:[#allocation11 + $0x104]]
          %v925 = vstv %s924
          %v926 = vmul.f32 %v925, %v719
          %v927 = vmul.f32 %v925, %v720
          %v928 = vadd.f32 %v922, %v926
          %v929 = vadd.f32 %v923, %v927
          %s930 = sld [smem:[#allocation11 + $0x105]]
          %v931 = vstv %s930
          %v932 = vmul.f32 %v931, %v719
          %v933 = vmul.f32 %v931, %v720
          %v936 = vrot.slane %v932, 1
          %v937 = vrot.slane %v933, 1
          %v938 = vsel %vm468, %v936, %v937
          %v941 = vadd.f32 %v928, %v938
          %v942 = vadd.f32 %v929, %v937
          %s943 = sld [smem:[#allocation11 + $0x106]]
          %v944 = vstv %s943
          %v945 = vmul.f32 %v944, %v730
          %v946 = vmul.f32 %v944, %v731
          %v947 = vadd.f32 %v941, %v945
          %v948 = vadd.f32 %v942, %v946
          %s949 = sld [smem:[#allocation11 + $0x107]]
          %v950 = vstv %s949
          %v951 = vmul.f32 %v950, %v730
          %v952 = vmul.f32 %v950, %v731
          %v955 = vrot.slane %v951, 1
          %v956 = vrot.slane %v952, 1
          %v957 = vsel %vm468, %v955, %v956
          %v960 = vadd.f32 %v947, %v957
          %v961 = vadd.f32 %v948, %v956
          %s962 = sld [smem:[#allocation13 + $0x2]]
          %v963 = vstv %s962
          %v964 = vadd.f32 %v960, %v963
          %v965 = vadd.f32 %v961, %v963
          %s966 = sld [smem:[#allocation11 + $0x180]]
          %v967 = vstv %s966
          %v968 = vmul.f32 %v967, %v651
          %v969 = vmul.f32 %v967, %v652
          %s970 = sld [smem:[#allocation11 + $0x181]]
          %v971 = vstv %s970
          %v972 = vmul.f32 %v971, %v651
          %v973 = vmul.f32 %v971, %v652
          %v976 = vrot.slane %v972, 1
          %v977 = vrot.slane %v973, 1
          %v978 = vsel %vm468, %v976, %v977
          %v981 = vadd.f32 %v968, %v978
          %v982 = vadd.f32 %v969, %v977
          %s983 = sld [smem:[#allocation11 + $0x182]]
          %v984 = vstv %s983
          %v985 = vmul.f32 %v984, %v662
          %v986 = vmul.f32 %v984, %v663
          %v987 = vadd.f32 %v981, %v985
          %v988 = vadd.f32 %v982, %v986
          %s989 = sld [smem:[#allocation11 + $0x183]]
          %v990 = vstv %s989
          %v991 = vmul.f32 %v990, %v662
          %v992 = vmul.f32 %v990, %v663
          %v995 = vrot.slane %v991, 1
          %v996 = vrot.slane %v992, 1
          %v997 = vsel %vm468, %v995, %v996
          %v1000 = vadd.f32 %v987, %v997
          %v1001 = vadd.f32 %v988, %v996
          %s1002 = sld [smem:[#allocation11 + $0x184]]
          %v1003 = vstv %s1002
          %v1004 = vmul.f32 %v1003, %v719
          %v1005 = vmul.f32 %v1003, %v720
          %v1006 = vadd.f32 %v1000, %v1004
          %v1007 = vadd.f32 %v1001, %v1005
          %s1008 = sld [smem:[#allocation11 + $0x185]]
          %v1009 = vstv %s1008
          %v1010 = vmul.f32 %v1009, %v719
          %v1011 = vmul.f32 %v1009, %v720
          %v1014 = vrot.slane %v1010, 1
          %v1015 = vrot.slane %v1011, 1
          %v1016 = vsel %vm468, %v1014, %v1015
          %v1019 = vadd.f32 %v1006, %v1016
          %v1020 = vadd.f32 %v1007, %v1015
          %s1021 = sld [smem:[#allocation11 + $0x186]]
          %v1022 = vstv %s1021
          %v1023 = vmul.f32 %v1022, %v730
          %v1024 = vmul.f32 %v1022, %v731
          %v1025 = vadd.f32 %v1019, %v1023
          %v1026 = vadd.f32 %v1020, %v1024
          %s1027 = sld [smem:[#allocation11 + $0x187]]
          %v1028 = vstv %s1027
          %v1029 = vmul.f32 %v1028, %v730
          %v1030 = vmul.f32 %v1028, %v731
          %v1033 = vrot.slane %v1029, 1
          %v1034 = vrot.slane %v1030, 1
          %v1035 = vsel %vm468, %v1033, %v1034
          %v1038 = vadd.f32 %v1025, %v1035
          %v1039 = vadd.f32 %v1026, %v1034
          %s1040 = sld [smem:[#allocation13 + $0x3]]
          %v1041 = vstv %s1040
          %v1042 = vadd.f32 %v1038, %v1041
          %v1043 = vadd.f32 %v1039, %v1041
          %s1044 = sld [smem:[#allocation11 + $0x200]]
          %v1045 = vstv %s1044
          %v1046 = vmul.f32 %v1045, %v651
          %v1047 = vmul.f32 %v1045, %v652
          %s1048 = sld [smem:[#allocation11 + $0x201]]
          %v1049 = vstv %s1048
          %v1050 = vmul.f32 %v1049, %v651
          %v1051 = vmul.f32 %v1049, %v652
          %v1054 = vrot.slane %v1050, 1
          %v1055 = vrot.slane %v1051, 1
          %v1056 = vsel %vm468, %v1054, %v1055
          %v1059 = vadd.f32 %v1046, %v1056
          %v1060 = vadd.f32 %v1047, %v1055
          %s1061 = sld [smem:[#allocation11 + $0x202]]
          %v1062 = vstv %s1061
          %v1063 = vmul.f32 %v1062, %v662
          %v1064 = vmul.f32 %v1062, %v663
          %v1065 = vadd.f32 %v1059, %v1063
          %v1066 = vadd.f32 %v1060, %v1064
          %s1067 = sld [smem:[#allocation11 + $0x203]]
          %v1068 = vstv %s1067
          %v1069 = vmul.f32 %v1068, %v662
          %v1070 = vmul.f32 %v1068, %v663
          %v1073 = vrot.slane %v1069, 1
          %v1074 = vrot.slane %v1070, 1
          %v1075 = vsel %vm468, %v1073, %v1074
          %v1078 = vadd.f32 %v1065, %v1075
          %v1079 = vadd.f32 %v1066, %v1074
          %s1080 = sld [smem:[#allocation11 + $0x204]]
          %v1081 = vstv %s1080
          %v1082 = vmul.f32 %v1081, %v719
          %v1083 = vmul.f32 %v1081, %v720
          %v1084 = vadd.f32 %v1078, %v1082
          %v1085 = vadd.f32 %v1079, %v1083
          %s1086 = sld [smem:[#allocation11 + $0x205]]
          %v1087 = vstv %s1086
          %v1088 = vmul.f32 %v1087, %v719
          %v1089 = vmul.f32 %v1087, %v720
          %v1092 = vrot.slane %v1088, 1
          %v1093 = vrot.slane %v1089, 1
          %v1094 = vsel %vm468, %v1092, %v1093
          %v1097 = vadd.f32 %v1084, %v1094
          %v1098 = vadd.f32 %v1085, %v1093
          %s1099 = sld [smem:[#allocation11 + $0x206]]
          %v1100 = vstv %s1099
          %v1101 = vmul.f32 %v1100, %v730
          %v1102 = vmul.f32 %v1100, %v731
          %v1103 = vadd.f32 %v1097, %v1101
          %v1104 = vadd.f32 %v1098, %v1102
          %s1105 = sld [smem:[#allocation11 + $0x207]]
          %v1106 = vstv %s1105
          %v1107 = vmul.f32 %v1106, %v730
          %v1108 = vmul.f32 %v1106, %v731
          %v1111 = vrot.slane %v1107, 1
          %v1112 = vrot.slane %v1108, 1
          %v1113 = vsel %vm468, %v1111, %v1112
          %v1116 = vadd.f32 %v1103, %v1113
          %v1117 = vadd.f32 %v1104, %v1112
          %s1118 = sld [smem:[#allocation13 + $0x4]]
          %v1119 = vstv %s1118
          %v1120 = vadd.f32 %v1116, %v1119
          %v1121 = vadd.f32 %v1117, %v1119
          %s1122 = sld [smem:[#allocation11 + $0x280]]
          %v1123 = vstv %s1122
          %v1124 = vmul.f32 %v1123, %v651
          %v1125 = vmul.f32 %v1123, %v652
          %s1126 = sld [smem:[#allocation11 + $0x281]]
          %v1127 = vstv %s1126
          %v1128 = vmul.f32 %v1127, %v651
          %v1129 = vmul.f32 %v1127, %v652
          %v1132 = vrot.slane %v1128, 1
          %v1133 = vrot.slane %v1129, 1
          %v1134 = vsel %vm468, %v1132, %v1133
          %v1137 = vadd.f32 %v1124, %v1134
          %v1138 = vadd.f32 %v1125, %v1133
          %s1139 = sld [smem:[#allocation11 + $0x282]]
          %v1140 = vstv %s1139
          %v1141 = vmul.f32 %v1140, %v662
          %v1142 = vmul.f32 %v1140, %v663
          %v1143 = vadd.f32 %v1137, %v1141
          %v1144 = vadd.f32 %v1138, %v1142
          %s1145 = sld [smem:[#allocation11 + $0x283]]
          %v1146 = vstv %s1145
          %v1147 = vmul.f32 %v1146, %v662
          %v1148 = vmul.f32 %v1146, %v663
          %v1151 = vrot.slane %v1147, 1
          %v1152 = vrot.slane %v1148, 1
          %v1153 = vsel %vm468, %v1151, %v1152
          %v1156 = vadd.f32 %v1143, %v1153
          %v1157 = vadd.f32 %v1144, %v1152
          %s1158 = sld [smem:[#allocation11 + $0x284]]
          %v1159 = vstv %s1158
          %v1160 = vmul.f32 %v1159, %v719
          %v1161 = vmul.f32 %v1159, %v720
          %v1162 = vadd.f32 %v1156, %v1160
          %v1163 = vadd.f32 %v1157, %v1161
          %s1164 = sld [smem:[#allocation11 + $0x285]]
          %v1165 = vstv %s1164
          %v1166 = vmul.f32 %v1165, %v719
          %v1167 = vmul.f32 %v1165, %v720
          %v1170 = vrot.slane %v1166, 1
          %v1171 = vrot.slane %v1167, 1
          %v1172 = vsel %vm468, %v1170, %v1171
          %v1175 = vadd.f32 %v1162, %v1172
          %v1176 = vadd.f32 %v1163, %v1171
          %s1177 = sld [smem:[#allocation11 + $0x286]]
          %v1178 = vstv %s1177
          %v1179 = vmul.f32 %v1178, %v730
          %v1180 = vmul.f32 %v1178, %v731
          %v1181 = vadd.f32 %v1175, %v1179
          %v1182 = vadd.f32 %v1176, %v1180
          %s1183 = sld [smem:[#allocation11 + $0x287]]
          %v1184 = vstv %s1183
          %v1185 = vmul.f32 %v1184, %v730
          %v1186 = vmul.f32 %v1184, %v731
          %v1189 = vrot.slane %v1185, 1
          %v1190 = vrot.slane %v1186, 1
          %v1191 = vsel %vm468, %v1189, %v1190
          %v1194 = vadd.f32 %v1181, %v1191
          %v1195 = vadd.f32 %v1182, %v1190
          %s1196 = sld [smem:[#allocation13 + $0x5]]
          %v1197 = vstv %s1196
          %v1198 = vadd.f32 %v1194, %v1197
          %v1199 = vadd.f32 %v1195, %v1197
          %s1200 = sld [smem:[#allocation11 + $0x300]]
          %v1201 = vstv %s1200
          %v1202 = vmul.f32 %v1201, %v651
          %v1203 = vmul.f32 %v1201, %v652
          %s1204 = sld [smem:[#allocation11 + $0x301]]
          %v1205 = vstv %s1204
          %v1206 = vmul.f32 %v1205, %v651
          %v1207 = vmul.f32 %v1205, %v652
          %v1210 = vrot.slane %v1206, 1
          %v1211 = vrot.slane %v1207, 1
          %v1212 = vsel %vm468, %v1210, %v1211
          %v1215 = vadd.f32 %v1202, %v1212
          %v1216 = vadd.f32 %v1203, %v1211
          %s1217 = sld [smem:[#allocation11 + $0x302]]
          %v1218 = vstv %s1217
          %v1219 = vmul.f32 %v1218, %v662
          %v1220 = vmul.f32 %v1218, %v663
          %v1221 = vadd.f32 %v1215, %v1219
          %v1222 = vadd.f32 %v1216, %v1220
          %s1223 = sld [smem:[#allocation11 + $0x303]]
          %v1224 = vstv %s1223
          %v1225 = vmul.f32 %v1224, %v662
          %v1226 = vmul.f32 %v1224, %v663
          %v1229 = vrot.slane %v1225, 1
          %v1230 = vrot.slane %v1226, 1
          %v1231 = vsel %vm468, %v1229, %v1230
          %v1234 = vadd.f32 %v1221, %v1231
          %v1235 = vadd.f32 %v1222, %v1230
          %s1236 = sld [smem:[#allocation11 + $0x304]]
          %v1237 = vstv %s1236
          %v1238 = vmul.f32 %v1237, %v719
          %v1239 = vmul.f32 %v1237, %v720
          %v1240 = vadd.f32 %v1234, %v1238
          %v1241 = vadd.f32 %v1235, %v1239
          %s1242 = sld [smem:[#allocation11 + $0x305]]
          %v1243 = vstv %s1242
          %v1244 = vmul.f32 %v1243, %v719
          %v1245 = vmul.f32 %v1243, %v720
          %v1248 = vrot.slane %v1244, 1
          %v1249 = vrot.slane %v1245, 1
          %v1250 = vsel %vm468, %v1248, %v1249
          %v1253 = vadd.f32 %v1240, %v1250
          %v1254 = vadd.f32 %v1241, %v1249
          %s1255 = sld [smem:[#allocation11 + $0x306]]
          %v1256 = vstv %s1255
          %v1257 = vmul.f32 %v1256, %v730
          %v1258 = vmul.f32 %v1256, %v731
          %v1259 = vadd.f32 %v1253, %v1257
          %v1260 = vadd.f32 %v1254, %v1258
          %s1261 = sld [smem:[#allocation11 + $0x307]]
          %v1262 = vstv %s1261
          %v1263 = vmul.f32 %v1262, %v730
          %v1264 = vmul.f32 %v1262, %v731
          %v1267 = vrot.slane %v1263, 1
          %v1268 = vrot.slane %v1264, 1
          %v1269 = vsel %vm468, %v1267, %v1268
          %v1272 = vadd.f32 %v1259, %v1269
          %v1273 = vadd.f32 %v1260, %v1268
          %s1274 = sld [smem:[#allocation13 + $0x6]]
          %v1275 = vstv %s1274
          %v1276 = vadd.f32 %v1272, %v1275
          %v1277 = vadd.f32 %v1273, %v1275
          %s1278 = sld [smem:[#allocation11 + $0x380]]
          %v1279 = vstv %s1278
          %v1280 = vmul.f32 %v1279, %v651
          %v1281 = vmul.f32 %v1279, %v652
          %s1282 = sld [smem:[#allocation11 + $0x381]]
          %v1283 = vstv %s1282
          %v1284 = vmul.f32 %v1283, %v651
          %v1285 = vmul.f32 %v1283, %v652
          %v1288 = vrot.slane %v1284, 1
          %v1289 = vrot.slane %v1285, 1
          %v1290 = vsel %vm468, %v1288, %v1289
          %v1293 = vadd.f32 %v1280, %v1290
          %v1294 = vadd.f32 %v1281, %v1289
          %s1295 = sld [smem:[#allocation11 + $0x382]]
          %v1296 = vstv %s1295
          %v1297 = vmul.f32 %v1296, %v662
          %v1298 = vmul.f32 %v1296, %v663
          %v1299 = vadd.f32 %v1293, %v1297
          %v1300 = vadd.f32 %v1294, %v1298
          %s1301 = sld [smem:[#allocation11 + $0x383]]
          %v1302 = vstv %s1301
          %v1303 = vmul.f32 %v1302, %v662
          %v1304 = vmul.f32 %v1302, %v663
          %v1307 = vrot.slane %v1303, 1
          %v1308 = vrot.slane %v1304, 1
          %v1309 = vsel %vm468, %v1307, %v1308
          %v1312 = vadd.f32 %v1299, %v1309
          %v1313 = vadd.f32 %v1300, %v1308
          %s1314 = sld [smem:[#allocation11 + $0x384]]
          %v1315 = vstv %s1314
          %v1316 = vmul.f32 %v1315, %v719
          %v1317 = vmul.f32 %v1315, %v720
          %v1318 = vadd.f32 %v1312, %v1316
          %v1319 = vadd.f32 %v1313, %v1317
          %s1320 = sld [smem:[#allocation11 + $0x385]]
          %v1321 = vstv %s1320
          %v1322 = vmul.f32 %v1321, %v719
          %v1323 = vmul.f32 %v1321, %v720
          %v1326 = vrot.slane %v1322, 1
          %v1327 = vrot.slane %v1323, 1
          %v1328 = vsel %vm468, %v1326, %v1327
          %v1331 = vadd.f32 %v1318, %v1328
          %v1332 = vadd.f32 %v1319, %v1327
          %s1333 = sld [smem:[#allocation11 + $0x386]]
          %v1334 = vstv %s1333
          %v1335 = vmul.f32 %v1334, %v730
          %v1336 = vmul.f32 %v1334, %v731
          %v1337 = vadd.f32 %v1331, %v1335
          %v1338 = vadd.f32 %v1332, %v1336
          %s1339 = sld [smem:[#allocation11 + $0x387]]
          %v1340 = vstv %s1339
          %v1341 = vmul.f32 %v1340, %v730
          %v1342 = vmul.f32 %v1340, %v731
          %v1345 = vrot.slane %v1341, 1
          %v1346 = vrot.slane %v1342, 1
          %v1347 = vsel %vm468, %v1345, %v1346
          %v1350 = vadd.f32 %v1337, %v1347
          %v1351 = vadd.f32 %v1338, %v1346
          %s1352 = sld [smem:[#allocation13 + $0x7]]
          %v1353 = vstv %s1352
          %v1354 = vadd.f32 %v1350, %v1353
          %v1355 = vadd.f32 %v1351, %v1353
          %vm1356 = vcmask 1044480
          %v1357 = vsel %vm1356, %v809, 0.0
          %v1358 = vadd.f32 %v808, %v1357
          %v1359 = vrot.slane %v1358, 4
          %v1360 = vadd.f32 %v1358, %v1359
          %v1361 = vrot.slane %v1360, 2
          %v1362 = vadd.f32 %v1360, %v1361
          %v1363 = vrot.slane %v1362, 1
          %v1364 = vadd.f32 %v1362, %v1363
          %v1365 = vsel %vm1356, %v887, 0.0
          %v1366 = vadd.f32 %v886, %v1365
          %v1367 = vrot.slane %v1366, 4
          %v1368 = vadd.f32 %v1366, %v1367
          %v1369 = vrot.slane %v1368, 2
          %v1370 = vadd.f32 %v1368, %v1369
          %v1371 = vrot.slane %v1370, 1
          %v1372 = vadd.f32 %v1370, %v1371
          %v1373 = vadd.f32 %v1364, %v1372
          %v1374 = vmul.f32 %v1373, 0.03846154
          %v1375 = vsub.f32 %v808, %v1374
          %v1376 = vsub.f32 %v809, %v1374
          %v1377 = vmul.f32 %v1375, %v1375
          %v1378 = vmul.f32 %v1376, %v1376
          %v1379 = vsel %vm1356, %v1378, 0.0
          %v1380 = vadd.f32 %v1377, %v1379
          %v1381 = vrot.slane %v1380, 4
          %v1382 = vadd.f32 %v1380, %v1381
          %v1383 = vrot.slane %v1382, 2
          %v1384 = vadd.f32 %v1382, %v1383
          %v1385 = vrot.slane %v1384, 1
          %v1386 = vadd.f32 %v1384, %v1385
          %v1387 = vsub.f32 %v886, %v1374
          %v1388 = vsub.f32 %v887, %v1374
          %v1389 = vmul.f32 %v1387, %v1387
          %v1390 = vmul.f32 %v1388, %v1388
          %v1391 = vsel %vm1356, %v1390, 0.0
          %v1392 = vadd.f32 %v1389, %v1391
          %v1393 = vrot.slane %v1392, 4
          %v1394 = vadd.f32 %v1392, %v1393
          %v1395 = vrot.slane %v1394, 2
          %v1396 = vadd.f32 %v1394, %v1395
          %v1397 = vrot.slane %v1396, 1
          %v1398 = vadd.f32 %v1396, %v1397
          %v1399 = vadd.f32 %v1386, %v1398
          %v1400 = vmul.f32 %v1399, 0.03846154
          %v1401 = vadd.f32 %v1400, 1e-05
          %v1402 = vrsqrt.pop %v1401
          %s1403 = sld [smem:[#allocation14]]
          %v1404 = vstv %s1403
          %v1405 = vmul.f32 %v1404, %v1402
          %v1406 = vmul.f32 %v1375, %v1405
          %v1407 = vmul.f32 %v1376, %v1405
          %s1408 = sld [smem:[#allocation16]]
          %v1409 = vstv %s1408
          %v1410 = vadd.f32 %v1406, %v1409
          %v1411 = vadd.f32 %v1407, %v1409
          %v1412 = vmax.f32 %v1410, 0.0
          %v1413 = vmax.f32 %v1411, 0.0
          %s1414 = smul.addr %s452, 8
          %s1415 = scalar_lea.vmem %s442, %s1414 [#allocation17]
          %1416 = vst [vmem:[%s1415] sm:$0xff] %v1412
          %1417 = vst [vmem:[%s1415 + $0x10] sm:$0x1f] %v1413
          %s1418 = sld [smem:[#allocation14 + $0x1]]
          %v1419 = vstv %s1418
          %v1420 = vmul.f32 %v1419, %v1402
          %v1421 = vmul.f32 %v1387, %v1420
          %v1422 = vmul.f32 %v1388, %v1420
          %s1423 = sld [smem:[#allocation16 + $0x1]]
          %v1424 = vstv %s1423
          %v1425 = vadd.f32 %v1421, %v1424
          %v1426 = vadd.f32 %v1422, %v1424
          %v1427 = vmax.f32 %v1425, 0.0
          %v1428 = vmax.f32 %v1426, 0.0
          %s1429 = sadd.s32 %s452, 4
          %s1430 = smul.addr %s1429, 8
          %s1431 = scalar_lea.vmem %s442, %s1430 [#allocation17]
          %1432 = vst [vmem:[%s1431] sm:$0xff] %v1427
          %1433 = vst [vmem:[%s1431 + $0x10] sm:$0x1f] %v1428
          %v1434 = vsel %vm1356, %v965, 0.0
          %v1435 = vadd.f32 %v964, %v1434
          %v1436 = vrot.slane %v1435, 4
          %v1437 = vadd.f32 %v1435, %v1436
          %v1438 = vrot.slane %v1437, 2
          %v1439 = vadd.f32 %v1437, %v1438
          %v1440 = vrot.slane %v1439, 1
          %v1441 = vadd.f32 %v1439, %v1440
          %v1442 = vsel %vm1356, %v1043, 0.0
          %v1443 = vadd.f32 %v1042, %v1442
          %v1444 = vrot.slane %v1443, 4
          %v1445 = vadd.f32 %v1443, %v1444
          %v1446 = vrot.slane %v1445, 2
          %v1447 = vadd.f32 %v1445, %v1446
          %v1448 = vrot.slane %v1447, 1
          %v1449 = vadd.f32 %v1447, %v1448
          %v1450 = vadd.f32 %v1441, %v1449
          %v1451 = vmul.f32 %v1450, 0.03846154
          %v1452 = vsub.f32 %v964, %v1451
          %v1453 = vsub.f32 %v965, %v1451
          %v1454 = vmul.f32 %v1452, %v1452
          %v1455 = vmul.f32 %v1453, %v1453
          %v1456 = vsel %vm1356, %v1455, 0.0
          %v1457 = vadd.f32 %v1454, %v1456
          %v1458 = vrot.slane %v1457, 4
          %v1459 = vadd.f32 %v1457, %v1458
          %v1460 = vrot.slane %v1459, 2
          %v1461 = vadd.f32 %v1459, %v1460
          %v1462 = vrot.slane %v1461, 1
          %v1463 = vadd.f32 %v1461, %v1462
          %v1464 = vsub.f32 %v1042, %v1451
          %v1465 = vsub.f32 %v1043, %v1451
          %v1466 = vmul.f32 %v1464, %v1464
          %v1467 = vmul.f32 %v1465, %v1465
          %v1468 = vsel %vm1356, %v1467, 0.0
          %v1469 = vadd.f32 %v1466, %v1468
          %v1470 = vrot.slane %v1469, 4
          %v1471 = vadd.f32 %v1469, %v1470
          %v1472 = vrot.slane %v1471, 2
          %v1473 = vadd.f32 %v1471, %v1472
          %v1474 = vrot.slane %v1473, 1
          %v1475 = vadd.f32 %v1473, %v1474
          %v1476 = vadd.f32 %v1463, %v1475
          %v1477 = vmul.f32 %v1476, 0.03846154
          %v1478 = vadd.f32 %v1477, 1e-05
          %v1479 = vrsqrt.pop %v1478
          %s1480 = sld [smem:[#allocation14 + $0x2]]
          %v1481 = vstv %s1480
          %v1482 = vmul.f32 %v1481, %v1479
          %v1483 = vmul.f32 %v1452, %v1482
          %v1484 = vmul.f32 %v1453, %v1482
          %s1485 = sld [smem:[#allocation16 + $0x2]]
          %v1486 = vstv %s1485
          %v1487 = vadd.f32 %v1483, %v1486
          %v1488 = vadd.f32 %v1484, %v1486
          %v1489 = vmax.f32 %v1487, 0.0
          %v1490 = vmax.f32 %v1488, 0.0
          %s1491 = sadd.s32 %s452, 8
          %s1492 = smul.addr %s1491, 8
          %s1493 = scalar_lea.vmem %s442, %s1492 [#allocation17]
          %1494 = vst [vmem:[%s1493] sm:$0xff] %v1489
          %1495 = vst [vmem:[%s1493 + $0x10] sm:$0x1f] %v1490
          %s1496 = sld [smem:[#allocation14 + $0x3]]
          %v1497 = vstv %s1496
          %v1498 = vmul.f32 %v1497, %v1479
          %v1499 = vmul.f32 %v1464, %v1498
          %v1500 = vmul.f32 %v1465, %v1498
          %s1501 = sld [smem:[#allocation16 + $0x3]]
          %v1502 = vstv %s1501
          %v1503 = vadd.f32 %v1499, %v1502
          %v1504 = vadd.f32 %v1500, %v1502
          %v1505 = vmax.f32 %v1503, 0.0
          %v1506 = vmax.f32 %v1504, 0.0
          %s1507 = sadd.s32 %s452, 12
          %s1508 = smul.addr %s1507, 8
          %s1509 = scalar_lea.vmem %s442, %s1508 [#allocation17]
          %1510 = vst [vmem:[%s1509] sm:$0xff] %v1505
          %1511 = vst [vmem:[%s1509 + $0x10] sm:$0x1f] %v1506
          %v1512 = vsel %vm1356, %v1121, 0.0
          %v1513 = vadd.f32 %v1120, %v1512
          %v1514 = vrot.slane %v1513, 4
          %v1515 = vadd.f32 %v1513, %v1514
          %v1516 = vrot.slane %v1515, 2
          %v1517 = vadd.f32 %v1515, %v1516
          %v1518 = vrot.slane %v1517, 1
          %v1519 = vadd.f32 %v1517, %v1518
          %v1520 = vsel %vm1356, %v1199, 0.0
          %v1521 = vadd.f32 %v1198, %v1520
          %v1522 = vrot.slane %v1521, 4
          %v1523 = vadd.f32 %v1521, %v1522
          %v1524 = vrot.slane %v1523, 2
          %v1525 = vadd.f32 %v1523, %v1524
          %v1526 = vrot.slane %v1525, 1
          %v1527 = vadd.f32 %v1525, %v1526
          %v1528 = vadd.f32 %v1519, %v1527
          %v1529 = vmul.f32 %v1528, 0.03846154
          %v1530 = vsub.f32 %v1120, %v1529
          %v1531 = vsub.f32 %v1121, %v1529
          %v1532 = vmul.f32 %v1530, %v1530
          %v1533 = vmul.f32 %v1531, %v1531
          %v1534 = vsel %vm1356, %v1533, 0.0
          %v1535 = vadd.f32 %v1532, %v1534
          %v1536 = vrot.slane %v1535, 4
          %v1537 = vadd.f32 %v1535, %v1536
          %v1538 = vrot.slane %v1537, 2
          %v1539 = vadd.f32 %v1537, %v1538
          %v1540 = vrot.slane %v1539, 1
          %v1541 = vadd.f32 %v1539, %v1540
          %v1542 = vsub.f32 %v1198, %v1529
          %v1543 = vsub.f32 %v1199, %v1529
          %v1544 = vmul.f32 %v1542, %v1542
          %v1545 = vmul.f32 %v1543, %v1543
          %v1546 = vsel %vm1356, %v1545, 0.0
          %v1547 = vadd.f32 %v1544, %v1546
          %v1548 = vrot.slane %v1547, 4
          %v1549 = vadd.f32 %v1547, %v1548
          %v1550 = vrot.slane %v1549, 2
          %v1551 = vadd.f32 %v1549, %v1550
          %v1552 = vrot.slane %v1551, 1
          %v1553 = vadd.f32 %v1551, %v1552
          %v1554 = vadd.f32 %v1541, %v1553
          %v1555 = vmul.f32 %v1554, 0.03846154
          %v1556 = vadd.f32 %v1555, 1e-05
          %v1557 = vrsqrt.pop %v1556
          %s1558 = sld [smem:[#allocation14 + $0x4]]
          %v1559 = vstv %s1558
          %v1560 = vmul.f32 %v1559, %v1557
          %v1561 = vmul.f32 %v1530, %v1560
          %v1562 = vmul.f32 %v1531, %v1560
          %s1563 = sld [smem:[#allocation16 + $0x4]]
          %v1564 = vstv %s1563
          %v1565 = vadd.f32 %v1561, %v1564
          %v1566 = vadd.f32 %v1562, %v1564
          %v1567 = vmax.f32 %v1565, 0.0
          %v1568 = vmax.f32 %v1566, 0.0
          %s1569 = sadd.s32 %s452, 16
          %s1570 = smul.addr %s1569, 8
          %s1571 = scalar_lea.vmem %s442, %s1570 [#allocation17]
          %1572 = vst [vmem:[%s1571] sm:$0xff] %v1567
          %1573 = vst [vmem:[%s1571 + $0x10] sm:$0x1f] %v1568
          %s1574 = sld [smem:[#allocation14 + $0x5]]
          %v1575 = vstv %s1574
          %v1576 = vmul.f32 %v1575, %v1557
          %v1577 = vmul.f32 %v1542, %v1576
          %v1578 = vmul.f32 %v1543, %v1576
          %s1579 = sld [smem:[#allocation16 + $0x5]]
          %v1580 = vstv %s1579
          %v1581 = vadd.f32 %v1577, %v1580
          %v1582 = vadd.f32 %v1578, %v1580
          %v1583 = vmax.f32 %v1581, 0.0
          %v1584 = vmax.f32 %v1582, 0.0
          %s1585 = sadd.s32 %s452, 20
          %s1586 = smul.addr %s1585, 8
          %s1587 = scalar_lea.vmem %s442, %s1586 [#allocation17]
          %1588 = vst [vmem:[%s1587] sm:$0xff] %v1583
          %1589 = vst [vmem:[%s1587 + $0x10] sm:$0x1f] %v1584
          %v1590 = vsel %vm1356, %v1277, 0.0
          %v1591 = vadd.f32 %v1276, %v1590
          %v1592 = vrot.slane %v1591, 4
          %v1593 = vadd.f32 %v1591, %v1592
          %v1594 = vrot.slane %v1593, 2
          %v1595 = vadd.f32 %v1593, %v1594
          %v1596 = vrot.slane %v1595, 1
          %v1597 = vadd.f32 %v1595, %v1596
          %v1598 = vsel %vm1356, %v1355, 0.0
          %v1599 = vadd.f32 %v1354, %v1598
          %v1600 = vrot.slane %v1599, 4
          %v1601 = vadd.f32 %v1599, %v1600
          %v1602 = vrot.slane %v1601, 2
          %v1603 = vadd.f32 %v1601, %v1602
          %v1604 = vrot.slane %v1603, 1
          %v1605 = vadd.f32 %v1603, %v1604
          %v1606 = vadd.f32 %v1597, %v1605
          %v1607 = vmul.f32 %v1606, 0.03846154
          %v1608 = vsub.f32 %v1276, %v1607
          %v1609 = vsub.f32 %v1277, %v1607
          %v1610 = vmul.f32 %v1608, %v1608
          %v1611 = vmul.f32 %v1609, %v1609
          %v1612 = vsel %vm1356, %v1611, 0.0
          %v1613 = vadd.f32 %v1610, %v1612
          %v1614 = vrot.slane %v1613, 4
          %v1615 = vadd.f32 %v1613, %v1614
          %v1616 = vrot.slane %v1615, 2
          %v1617 = vadd.f32 %v1615, %v1616
          %v1618 = vrot.slane %v1617, 1
          %v1619 = vadd.f32 %v1617, %v1618
          %v1620 = vsub.f32 %v1354, %v1607
          %v1621 = vsub.f32 %v1355, %v1607
          %v1622 = vmul.f32 %v1620, %v1620
          %v1623 = vmul.f32 %v1621, %v1621
          %v1624 = vsel %vm1356, %v1623, 0.0
          %v1625 = vadd.f32 %v1622, %v1624
          %v1626 = vrot.slane %v1625, 4
          %v1627 = vadd.f32 %v1625, %v1626
          %v1628 = vrot.slane %v1627, 2
          %v1629 = vadd.f32 %v1627, %v1628
          %v1630 = vrot.slane %v1629, 1
          %v1631 = vadd.f32 %v1629, %v1630
          %v1632 = vadd.f32 %v1619, %v1631
          %v1633 = vmul.f32 %v1632, 0.03846154
          %v1634 = vadd.f32 %v1633, 1e-05
          %v1635 = vrsqrt.pop %v1634
          %s1636 = sld [smem:[#allocation14 + $0x6]]
          %v1637 = vstv %s1636
          %v1638 = vmul.f32 %v1637, %v1635
          %v1639 = vmul.f32 %v1608, %v1638
          %v1640 = vmul.f32 %v1609, %v1638
          %s1641 = sld [smem:[#allocation16 + $0x6]]
          %v1642 = vstv %s1641
          %v1643 = vadd.f32 %v1639, %v1642
          %v1644 = vadd.f32 %v1640, %v1642
          %v1645 = vmax.f32 %v1643, 0.0
          %v1646 = vmax.f32 %v1644, 0.0
          %s1647 = sadd.s32 %s452, 24
          %s1648 = smul.addr %s1647, 8
          %s1649 = scalar_lea.vmem %s442, %s1648 [#allocation17]
          %1650 = vst [vmem:[%s1649] sm:$0xff] %v1645
          %1651 = vst [vmem:[%s1649 + $0x10] sm:$0x1f] %v1646
          %s1652 = sld [smem:[#allocation14 + $0x7]]
          %v1653 = vstv %s1652
          %v1654 = vmul.f32 %v1653, %v1635
          %v1655 = vmul.f32 %v1620, %v1654
          %v1656 = vmul.f32 %v1621, %v1654
          %s1657 = sld [smem:[#allocation16 + $0x7]]
          %v1658 = vstv %s1657
          %v1659 = vadd.f32 %v1655, %v1658
          %v1660 = vadd.f32 %v1656, %v1658
          %v1661 = vmax.f32 %v1659, 0.0
          %v1662 = vmax.f32 %v1660, 0.0
          %s1663 = sadd.s32 %s452, 28
          %s1664 = smul.addr %s1663, 8
          %s1665 = scalar_lea.vmem %s442, %s1664 [#allocation17]
          %1666 = vst [vmem:[%s1665] sm:$0xff] %v1661
          %1667 = vst [vmem:[%s1665 + $0x10] sm:$0x1f] %v1662
        $region97: #{tpu_custom_call.1} parent=55 // loop_footer
          %s450 = sadd.s32 1, %s446
        $region98: #{tpu_custom_call.1} parent=55 // loop_footer_branch
          %445 = sbr.rel target = $region94
        $region99: #{tpu_custom_call.1} parent=55 // loop_exit
          _
        %s1668 = sand.u32 %s230, 1
        %s1669 = sand.u32 %s230, 1
        %s1670 = smul.addr %s1669, 256
        %s1671 = scalar_lea.vmem [#allocation17], %s1670
        // Predicated region
        $region100: #{tpu_custom_call.1} parent=55 // pred_check
          %p1672 = pneg %p240
        $region101: #{tpu_custom_call.1} parent=55 // pred_check_branch
          %1674 = sbr.rel (%p1672) target = $region103
        $region102: #{tpu_custom_call.1} parent=55 // pred_region
          %s1675 = smul.u32 2, %s28
          %s1676 = smul.addr %s1675, 8
          %s1677 = scalar_lea.vmem %s9, %s1676
          // Predicated region
          $region104: #{tpu_custom_call.1} parent=102 // pred_check
            _
          $region105: #{tpu_custom_call.1} parent=102 // pred_check_branch
            %1679 = sbr.rel (0) target = $region107
          $region106: #{tpu_custom_call.1} parent=102 // pred_region
            // Predicated region
            $region108: #{tpu_custom_call.1} parent=106 // pred_check
              _
            $region109: #{tpu_custom_call.1} parent=106 // pred_check_branch
              %1681 = sbr.rel (0) target = $region111
            $region110: #{tpu_custom_call.1} parent=106 // pred_region
              loop: start=0, step=1, limit=1
              $region112: #{tpu_custom_call.1} parent=110 // loop_pre_header
                _
              $region113: #{tpu_custom_call.1} parent=110 // loop_header
                %s1683 = sphi 0, %s1687
                %p1684 = scmp.ge.s32.totalorder %s1683, 1
                %s1688 = sphi %s1671, %s1671
                %s1689 = sphi %s1677, %s1677
              $region114: #{tpu_custom_call.1} parent=110 // loop_header_branch
                %1686 = sbr.rel (%p1684) target = $region118
              $region115: #{tpu_custom_call.1} parent=110 // loop_body
                %v1690 = vld [vmem:[%s1688] sm:$0xff]
                %1691 = vst [vmem:[%s1689] sm:$0xff] %v1690
                %v1692 = vld [vmem:[%s1688 + $0x8] sm:$0xff]
                %1693 = vst [vmem:[%s1689 + $0x8] sm:$0xff] %v1692
                %v1694 = vld [vmem:[%s1688 + $0x10] sm:$0xff]
                %1695 = vst [vmem:[%s1689 + $0x20] sm:$0xff] %v1694
                %v1696 = vld [vmem:[%s1688 + $0x18] sm:$0xff]
                %1697 = vst [vmem:[%s1689 + $0x28] sm:$0xff] %v1696
                %v1698 = vld [vmem:[%s1688 + $0x20] sm:$0xff]
                %1699 = vst [vmem:[%s1689 + $0x40] sm:$0xff] %v1698
                %v1700 = vld [vmem:[%s1688 + $0x28] sm:$0xff]
                %1701 = vst [vmem:[%s1689 + $0x48] sm:$0xff] %v1700
                %v1702 = vld [vmem:[%s1688 + $0x30] sm:$0xff]
                %1703 = vst [vmem:[%s1689 + $0x60] sm:$0xff] %v1702
                %v1704 = vld [vmem:[%s1688 + $0x38] sm:$0xff]
                %1705 = vst [vmem:[%s1689 + $0x68] sm:$0xff] %v1704
                %v1706 = vld [vmem:[%s1688 + $0x40] sm:$0xff]
                %1707 = vst [vmem:[%s1689 + $0x80] sm:$0xff] %v1706
                %v1708 = vld [vmem:[%s1688 + $0x48] sm:$0xff]
                %1709 = vst [vmem:[%s1689 + $0x88] sm:$0xff] %v1708
                %v1710 = vld [vmem:[%s1688 + $0x50] sm:$0xff]
                %1711 = vst [vmem:[%s1689 + $0xa0] sm:$0xff] %v1710
                %v1712 = vld [vmem:[%s1688 + $0x58] sm:$0xff]
                %1713 = vst [vmem:[%s1689 + $0xa8] sm:$0xff] %v1712
                %v1714 = vld [vmem:[%s1688 + $0x60] sm:$0xff]
                %1715 = vst [vmem:[%s1689 + $0xc0] sm:$0xff] %v1714
                %v1716 = vld [vmem:[%s1688 + $0x68] sm:$0xff]
                %1717 = vst [vmem:[%s1689 + $0xc8] sm:$0xff] %v1716
                %v1718 = vld [vmem:[%s1688 + $0x70] sm:$0xff]
                %1719 = vst [vmem:[%s1689 + $0xe0] sm:$0xff] %v1718
                %v1720 = vld [vmem:[%s1688 + $0x78] sm:$0xff]
                %1721 = vst [vmem:[%s1689 + $0xe8] sm:$0xff] %v1720
                %v1722 = vld [vmem:[%s1688 + $0x80] sm:$0xff]
                %1723 = vst [vmem:[%s1689 + $0x100] sm:$0xff] %v1722
                %v1724 = vld [vmem:[%s1688 + $0x88] sm:$0xff]
                %1725 = vst [vmem:[%s1689 + $0x108] sm:$0xff] %v1724
                %v1726 = vld [vmem:[%s1688 + $0x90] sm:$0xff]
                %1727 = vst [vmem:[%s1689 + $0x120] sm:$0xff] %v1726
                %v1728 = vld [vmem:[%s1688 + $0x98] sm:$0xff]
                %1729 = vst [vmem:[%s1689 + $0x128] sm:$0xff] %v1728
                %v1730 = vld [vmem:[%s1688 + $0xa0] sm:$0xff]
                %1731 = vst [vmem:[%s1689 + $0x140] sm:$0xff] %v1730
                %v1732 = vld [vmem:[%s1688 + $0xa8] sm:$0xff]
                %1733 = vst [vmem:[%s1689 + $0x148] sm:$0xff] %v1732
                %v1734 = vld [vmem:[%s1688 + $0xb0] sm:$0xff]
                %1735 = vst [vmem:[%s1689 + $0x160] sm:$0xff] %v1734
                %v1736 = vld [vmem:[%s1688 + $0xb8] sm:$0xff]
                %1737 = vst [vmem:[%s1689 + $0x168] sm:$0xff] %v1736
                %v1738 = vld [vmem:[%s1688 + $0xc0] sm:$0xff]
                %1739 = vst [vmem:[%s1689 + $0x180] sm:$0xff] %v1738
                %v1740 = vld [vmem:[%s1688 + $0xc8] sm:$0xff]
                %1741 = vst [vmem:[%s1689 + $0x188] sm:$0xff] %v1740
                %v1742 = vld [vmem:[%s1688 + $0xd0] sm:$0xff]
                %1743 = vst [vmem:[%s1689 + $0x1a0] sm:$0xff] %v1742
                %v1744 = vld [vmem:[%s1688 + $0xd8] sm:$0xff]
                %1745 = vst [vmem:[%s1689 + $0x1a8] sm:$0xff] %v1744
                %v1746 = vld [vmem:[%s1688 + $0xe0] sm:$0xff]
                %1747 = vst [vmem:[%s1689 + $0x1c0] sm:$0xff] %v1746
                %v1748 = vld [vmem:[%s1688 + $0xe8] sm:$0xff]
                %1749 = vst [vmem:[%s1689 + $0x1c8] sm:$0xff] %v1748
                %v1750 = vld [vmem:[%s1688 + $0xf0] sm:$0xff]
                %1751 = vst [vmem:[%s1689 + $0x1e0] sm:$0xff] %v1750
                %v1752 = vld [vmem:[%s1688 + $0xf8] sm:$0xff]
                %1753 = vst [vmem:[%s1689 + $0x1e8] sm:$0xff] %v1752
              $region116: #{tpu_custom_call.1} parent=110 // loop_footer
                %s1687 = sadd.s32 1, %s1683
              $region117: #{tpu_custom_call.1} parent=110 // loop_footer_branch
                %1682 = sbr.rel target = $region113
              $region118: #{tpu_custom_call.1} parent=110 // loop_exit
                _
            $region111: #{tpu_custom_call.1} parent=106 // pred_fallthru
              _
            // Predicated region
            $region119: #{tpu_custom_call.1} parent=106 // pred_check
              _
            $region120: #{tpu_custom_call.1} parent=106 // pred_check_branch
              %1755 = sbr.rel target = $region122
            $region121: #{tpu_custom_call.1} parent=106 // pred_region
              _
            $region122: #{tpu_custom_call.1} parent=106 // pred_fallthru
              _
          $region107: #{tpu_custom_call.1} parent=102 // pred_fallthru
            _
          %1756 = vnop
        $region103: #{tpu_custom_call.1} parent=55 // pred_fallthru
          _
      $region56: #{tpu_custom_call.1} parent=5 // pred_fallthru
        _
      %p1757 = scmp.le.s32.totalorder 2, %s23
      // Predicated region
      $region123: #{tpu_custom_call.1} parent=5 // pred_check
        %p1758 = pneg %p1757
      $region124: #{tpu_custom_call.1} parent=5 // pred_check_branch
        %1760 = sbr.rel (%p1758) target = $region126
      $region125: #{tpu_custom_call.1} parent=5 // pred_region
        %s1761 = ssub.s32 %s23, 2
        // Predicated region
        $region127: #{tpu_custom_call.1} parent=125 // pred_check
          %p1762 = pneg %p246
        $region128: #{tpu_custom_call.1} parent=125 // pred_check_branch
          %1764 = sbr.rel (%p1762) target = $region130
        $region129: #{tpu_custom_call.1} parent=125 // pred_region
          %s1765 = sand.u32 %s231, 1
          %s1766 = sand.u32 %s231, 1
          %s1767 = smul.addr %s1766, 256
          %s1768 = scalar_lea.vmem [#allocation17], %s1767
        $region130: #{tpu_custom_call.1} parent=125 // pred_fallthru
          _
      $region126: #{tpu_custom_call.1} parent=5 // pred_fallthru
        _
    $region6: #{tpu_custom_call.1} parent=1 // loop_footer
      %s27 = sadd.s32 1, %s23
    $region7: #{tpu_custom_call.1} parent=1 // loop_footer_branch
      %22 = sbr.rel target = $region3
    $region8: #{tpu_custom_call.1} parent=1 // loop_exit
      _
    %1769 = vsyncpa [#allocation3], 1
    %s1770 = scalar_lea.sflag [#allocation3], 1
    %1771 = vsyncpa %s1770, 1
    %1772 = vsyncpa [#allocation4], 1
    %s1773 = scalar_lea.sflag [#allocation4], 1
    %1774 = vsyncpa %s1773, 1
    %1775 = vsyncpa [#allocation9], 1
    %1776 = vsyncpa [#allocation5], 1
    %s1777 = scalar_lea.sflag [#allocation5], 1
    %1778 = vsyncpa %s1777, 1
    %1779 = vsyncpa [#allocation12], 1
    %1780 = vsyncpa [#allocation15], 1

</llo_original>
